<compile_context>
chip_gen: v5e
topology: v5e:2x2
jax: 0.10.0
libtpu: 0.0.40
codegen_flags: <defaults>
</compile_context>

<pallas_src>
import functools

import numpy as np

import jax
import jax.numpy as jnp
from jax.experimental import pallas as pl
from jax.experimental.pallas import tpu as pltpu


# ----------------------------------------------------------------------------
# Single fused kernel: encoder (dense-folded conv) -> [fc_mu | fc_logvar] ->
# reparameterize -> composed (fc_z_to_h o ConvTranspose2d) decoder -> tanh.
# Three chained MXU dots; bf16 operands, f32 accumulation, f32 epilogues.
# ----------------------------------------------------------------------------
def _vae_fused_kernel(x_ref, eps_ref, wenc_ref, benc_ref, wmv_ref, bmv_ref,
                      wdec_ref, bdec_ref, xrec_ref, mu_ref, logvar_ref):
    z_dim = eps_ref.shape[-1]

    # encoder: ReLU(x @ W_enc + b_enc)   (Conv2d 3x3/s2/p1 folded into W_enc)
    xb = x_ref[...].astype(jnp.bfloat16)                        # (B, C*H*W)
    h = jnp.dot(xb, wenc_ref[...], preferred_element_type=jnp.float32)
    h = jnp.maximum(h + benc_ref[...], 0.0)                     # (B, nf) f32

    # latent: [mu | logvar] as one dot, then reparameterize (exp on the EUP)
    mulv = jnp.dot(h.astype(jnp.bfloat16), wmv_ref[...],
                   preferred_element_type=jnp.float32) + bmv_ref[...]
    mu = mulv[:, :z_dim]
    logvar = mulv[:, z_dim:]
    std = jnp.exp(0.5 * logvar)
    z = mu + eps_ref[...] * std                                 # (B, Z) f32

    # decoder: tanh(z @ W_dec + b_dec); W_dec = fc_z_to_h composed with the
    # ConvTranspose2d(4x4,s2,p1); output already in flattened NCHW order.
    xpre = jnp.dot(z.astype(jnp.bfloat16), wdec_ref[...],
                   preferred_element_type=jnp.float32) + bdec_ref[...]
    xrec_ref[...] = jnp.tanh(xpre)                              # (B, C*H*W) f32
    mu_ref[...] = mu
    logvar_ref[...] = logvar


def vae_fused(prep, x_flat, eps):
    B = x_flat.shape[0]
    z_dim = eps.shape[-1]
    out_dim = prep["w_dec"].shape[-1]
    vmem = pl.BlockSpec(memory_space=pltpu.MemorySpace.VMEM)
    # Single block, no grid: the whole batch is one matmul-M; for large B you
    # would add a leading "parallel" batch grid axis, unnecessary at this size.
    return pl.pallas_call(
        _vae_fused_kernel,
        out_shape=(jax.ShapeDtypeStruct((B, out_dim), jnp.float32),
                   jax.ShapeDtypeStruct((B, z_dim), jnp.float32),
                   jax.ShapeDtypeStruct((B, z_dim), jnp.float32)),
        in_specs=[vmem] * 8,
        out_specs=(vmem, vmem, vmem),
    )(x_flat, eps, prep["w_enc"], prep["b_enc"], prep["w_mulv"], prep["b_mulv"],
      prep["w_dec"], prep["b_dec"])


# ----------------------------------------------------------------------------
# Parameters: deterministic PyTorch-style init + one-time re-layout / folding.
# ----------------------------------------------------------------------------
def init_vae_params(key, *, in_channels, feat_channels, spatial, z_dim):
    """features_encoder = Conv2d(C,F,3,s=2,p=1)+ReLU
       features_decoder = ConvTranspose2d(F,C,4,s=2,p=1)  (tanh applied by VAE)."""
    C, F_ = in_channels, feat_channels
    Hf = spatial // 2
    n_features = F_ * Hf * Hf
    ks = jax.random.split(key, 10)

    def uni(k, shape, fan_in):
        bound = 1.0 / float(fan_in) ** 0.5
        return jax.random.uniform(k, shape, jnp.float32, -bound, bound)

    return {
        "enc_w": uni(ks[0], (F_, C, 3, 3), C * 9),
        "enc_b": uni(ks[1], (F_,), C * 9),
        "dec_w": uni(ks[2], (F_, C, 4, 4), F_ * 16),     # ConvTranspose weight
        "dec_b": uni(ks[3], (C,), F_ * 16),
        "fc_mu_w": uni(ks[4], (z_dim, n_features), n_features),
        "fc_mu_b": uni(ks[5], (z_dim,), n_features),
        "fc_logvar_w": uni(ks[6], (z_dim, n_features), n_features),
        "fc_logvar_b": uni(ks[7], (z_dim,), n_features),
        "fc_z_to_h_w": uni(ks[8], (n_features, z_dim), z_dim),
        "fc_z_to_h_b": uni(ks[9], (n_features,), z_dim),
        "features_shape": (F_, Hf, Hf),
    }


def _conv_shift(n_out, n_in, ksize, stride, pad):
    """S[k, o, i] = 1.0 where i == stride*o + k - pad  (conv/deconv index map)."""
    s = np.zeros((ksize, n_out, n_in), np.float32)
    for k in range(ksize):
        for o in range(n_out):
            i = stride * o + k - pad
            if 0 <= i < n_in:
                s[k, o, i] = 1.0
    return jnp.asarray(s)


def prepare_params(params):
    """One-time constant-folding of the PyTorch parameters into three 2-D,
    lane-dense bf16 matrices (f32 biases).  Nothing here runs per forward."""
    F, C, kh, kw = params["enc_w"].shape
    assert (kh, kw) == (3, 3)
    F2, Hf, Wf = params["features_shape"]
    assert F2 == F
    Z, nf = params["fc_mu_w"].shape
    assert nf == F * Hf * Wf
    C_out = params["dec_w"].shape[1]
    assert tuple(params["dec_w"].shape[2:]) == (4, 4)
    H, W = 2 * Hf, 2 * Wf
    bf16 = jnp.bfloat16

    s3 = _conv_shift(Hf, H, 3, stride=2, pad=1)       # (3, Hf, H): y = 2h + ky - 1
    s4 = _conv_shift(Hf, H, 4, stride=2, pad=1)       # (4, Hf, H): same map for ConvT

    # --- encoder Conv2d(3x3,s2,p1) folded to a dense (C*H*W, F*Hf*Wf) matrix ---
    # K ordering (c,y,x) == NCHW flatten of x; N ordering (f,hf,wf) == PyTorch's
    # h.view(B,-1) flatten, so fc_mu/fc_logvar need no K permutation.
    w_enc = jnp.einsum("fcuv,uhy,vwx->cyxfhw", params["enc_w"], s3, s3)
    w_enc = w_enc.reshape(C * H * W, nf)
    b_enc = jnp.broadcast_to(params["enc_b"][:, None, None], (F, Hf, Wf)).reshape(1, nf)

    # --- fc_mu / fc_logvar fused along N ---
    w_mulv = jnp.concatenate([params["fc_mu_w"].T, params["fc_logvar_w"].T], axis=1)
    b_mulv = jnp.concatenate([params["fc_mu_b"], params["fc_logvar_b"]]).reshape(1, 2 * Z)

    # --- decoder: fc_z_to_h composed with ConvTranspose2d(4x4,s2,p1) ---
    # A[(f,h,w),(c,y,x)] = dec_w[f,c,ky,kx] where y=2h+ky-1, x=2w+kx-1 (else 0).
    A = jnp.einsum("fcuv,uhy,vwx->fhwcyx", params["dec_w"], s4, s4)
    wz3 = params["fc_z_to_h_w"].reshape(F, Hf, Wf, Z)
    w_dec = jnp.einsum("fhwz,fhwcyx->zcyx", wz3, A).reshape(Z, C_out * H * W)
    b_dec = (jnp.einsum("fhw,fhwcyx->cyx",
                        params["fc_z_to_h_b"].reshape(F, Hf, Wf), A)
             + params["dec_b"][:, None, None]).reshape(1, C_out * H * W)

    return {
        "z_dim": Z,
        "out_shape": (C_out, H, W),
        "w_enc": w_enc.astype(bf16),
        "b_enc": b_enc.astype(jnp.float32),
        "w_mulv": w_mulv.astype(bf16),
        "b_mulv": b_mulv.astype(jnp.float32),
        "w_dec": w_dec.astype(bf16),
        "b_dec": b_dec.astype(jnp.float32),
    }


# ----------------------------------------------------------------------------
# Forward pass (same contract as VAE.forward: returns x_rec, mu, log_sigma2).
# The reparameterization noise (torch.randn_like) is passed in as `eps`.
# ----------------------------------------------------------------------------
def vae_forward(prep, x, eps):
    B = x.shape[0]
    x_flat = x.reshape(B, -1)                          # contiguous NCHW flatten
    xrec_flat, mu, log_sigma2 = vae_fused(prep, x_flat, eps)
    x_rec = xrec_flat.reshape(B, *prep["out_shape"])   # contiguous -> NCHW
    return x_rec, mu, log_sigma2


def vae_forward_ref(params, x, eps):
    """Plain-JAX float32 reference with exact PyTorch semantics (validation)."""
    F = params["enc_w"].shape[0]
    B = x.shape[0]
    hf = jax.lax.conv_general_dilated(
        x, params["enc_w"], window_strides=(2, 2), padding=((1, 1), (1, 1)),
        dimension_numbers=("NCHW", "OIHW", "NCHW"))
    hf = jax.nn.relu(hf + params["enc_b"].reshape(1, F, 1, 1))
    h = hf.reshape(B, -1)
    mu = h @ params["fc_mu_w"].T + params["fc_mu_b"]
    logvar = h @ params["fc_logvar_w"].T + params["fc_logvar_b"]
    z = mu + eps * jnp.exp(0.5 * logvar)
    h2 = (z @ params["fc_z_to_h_w"].T + params["fc_z_to_h_b"]
          ).reshape(B, *params["features_shape"])
    w_conv = jnp.transpose(params["dec_w"][:, :, ::-1, ::-1], (1, 0, 2, 3))
    xr = jax.lax.conv_general_dilated(
        h2, w_conv, window_strides=(1, 1), padding=((2, 2), (2, 2)),
        lhs_dilation=(2, 2), dimension_numbers=("NCHW", "OIHW", "NCHW"))
    xr = jnp.tanh(xr + params["dec_b"].reshape(1, -1, 1, 1))
    return xr, mu, logvar


if __name__ == "__main__":
    key = jax.random.PRNGKey(0)
    k_x, k_eps, k_params = jax.random.split(key, 3)

    B, C, H, W = 2, 4, 16, 16
    z_dim = 32
    feat_channels = 8

    params = init_vae_params(k_params, in_channels=C,
                             feat_channels=feat_channels,
                             spatial=H, z_dim=z_dim)
    prep = prepare_params(params)

    x = jax.random.normal(k_x, (B, C, H, W), jnp.float32)
    eps = jax.random.normal(k_eps, (B, z_dim), jnp.float32)  # torch.randn_like(std)

    fwd = jax.jit(functools.partial(vae_forward, prep))
    x_rec, mu, log_sigma2 = fwd(x, eps)
    jax.block_until_ready((x_rec, mu, log_sigma2))

    assert x_rec.shape == x.shape, (x_rec.shape, x.shape)
    assert mu.shape == (B, z_dim) and log_sigma2.shape == (B, z_dim)
    assert bool(jnp.all(jnp.abs(x_rec) <= 1.0 + 1e-5))       # tanh range check

    # numerical check vs. float32 reference (loose tolerance for bf16 MXU inputs)
    xr_ref, mu_r, lv_r = vae_forward_ref(params, x, eps)
    err = max(float(jnp.max(jnp.abs(x_rec - xr_ref))),
              float(jnp.max(jnp.abs(mu - mu_r))),
              float(jnp.max(jnp.abs(log_sigma2 - lv_r))))
    assert err < 3e-2, f"mismatch vs reference: {err}"

    print("KERNEL_OK")
</pallas_src>

<mosaic_0001>
module attributes {stable_mosaic.version = 11 : i64} {
  func.func @_vae_fused_kernel(%arg0: memref<2x1024xf32, #tpu.memory_space<vmem>>, %arg1: memref<2x32xf32, #tpu.memory_space<vmem>>, %arg2: memref<1024x512xbf16, #tpu.memory_space<vmem>>, %arg3: memref<1x512xf32, #tpu.memory_space<vmem>>, %arg4: memref<512x64xbf16, #tpu.memory_space<vmem>>, %arg5: memref<1x64xf32, #tpu.memory_space<vmem>>, %arg6: memref<32x1024xbf16, #tpu.memory_space<vmem>>, %arg7: memref<1x1024xf32, #tpu.memory_space<vmem>>, %arg8: memref<2x1024xf32, #tpu.memory_space<vmem>>, %arg9: memref<2x32xf32, #tpu.memory_space<vmem>>, %arg10: memref<2x32xf32, #tpu.memory_space<vmem>>) attributes {dimension_semantics = [], scalar_prefetch = 0 : i64, scratch_operands = 0 : i64, tpu.core_type = #tpu.core_type<tc>} {
    %c0 = arith.constant 0 : index
    %c0_0 = arith.constant 0 : index
    %0 = vector.load %arg0[%c0, %c0_0] : memref<2x1024xf32, #tpu.memory_space<vmem>>, vector<2x1024xf32>
    %1 = arith.truncf %0 : vector<2x1024xf32> to vector<2x1024xbf16>
    %c0_1 = arith.constant 0 : index
    %c0_2 = arith.constant 0 : index
    %2 = vector.load %arg2[%c0_1, %c0_2] : memref<1024x512xbf16, #tpu.memory_space<vmem>>, vector<1024x512xbf16>
    %cst = arith.constant dense<0.000000e+00> : vector<2x512xf32>
    %3 = tpu.matmul %1, %2, %cst {dimension_numbers = #tpu.dot_dimension_numbers<[1], [0], [0], [1], [0, 0, 1, 1], [], []>} : vector<2x1024xbf16>, vector<1024x512xbf16>, vector<2x512xf32> -> vector<2x512xf32>
    %c0_3 = arith.constant 0 : index
    %c0_4 = arith.constant 0 : index
    %4 = vector.load %arg3[%c0_3, %c0_4] : memref<1x512xf32, #tpu.memory_space<vmem>>, vector<1x512xf32>
    %5 = vector.broadcast %4 : vector<1x512xf32> to vector<2x512xf32>
    %6 = arith.addf %3, %5 : vector<2x512xf32>
    %cst_5 = arith.constant 0.000000e+00 : f32
    %7 = vector.broadcast %cst_5 : f32 to vector<2x512xf32>
    %8 = arith.maximumf %6, %7 : vector<2x512xf32>
    %9 = arith.truncf %8 : vector<2x512xf32> to vector<2x512xbf16>
    %c0_6 = arith.constant 0 : index
    %c0_7 = arith.constant 0 : index
    %10 = vector.load %arg4[%c0_6, %c0_7] : memref<512x64xbf16, #tpu.memory_space<vmem>>, vector<512x64xbf16>
    %cst_8 = arith.constant dense<0.000000e+00> : vector<2x64xf32>
    %11 = tpu.matmul %9, %10, %cst_8 {dimension_numbers = #tpu.dot_dimension_numbers<[1], [0], [0], [1], [0, 0, 1, 1], [], []>} : vector<2x512xbf16>, vector<512x64xbf16>, vector<2x64xf32> -> vector<2x64xf32>
    %c0_9 = arith.constant 0 : index
    %c0_10 = arith.constant 0 : index
    %12 = vector.load %arg5[%c0_9, %c0_10] : memref<1x64xf32, #tpu.memory_space<vmem>>, vector<1x64xf32>
    %13 = vector.broadcast %12 : vector<1x64xf32> to vector<2x64xf32>
    %14 = arith.addf %11, %13 : vector<2x64xf32>
    %15 = vector.extract_strided_slice %14 {offsets = [0, 0], sizes = [2, 32], strides = [1, 1]} : vector<2x64xf32> to vector<2x32xf32>
    %16 = vector.extract_strided_slice %14 {offsets = [0, 32], sizes = [2, 32], strides = [1, 1]} : vector<2x64xf32> to vector<2x32xf32>
    %cst_11 = arith.constant 5.000000e-01 : f32
    %17 = vector.broadcast %cst_11 : f32 to vector<2x32xf32>
    %18 = arith.mulf %17, %16 : vector<2x32xf32>
    %19 = math.exp %18 : vector<2x32xf32>
    %c0_12 = arith.constant 0 : index
    %c0_13 = arith.constant 0 : index
    %20 = vector.load %arg1[%c0_12, %c0_13] : memref<2x32xf32, #tpu.memory_space<vmem>>, vector<2x32xf32>
    %21 = arith.mulf %20, %19 : vector<2x32xf32>
    %22 = arith.addf %15, %21 : vector<2x32xf32>
    %23 = arith.truncf %22 : vector<2x32xf32> to vector<2x32xbf16>
    %c0_14 = arith.constant 0 : index
    %c0_15 = arith.constant 0 : index
    %24 = vector.load %arg6[%c0_14, %c0_15] : memref<32x1024xbf16, #tpu.memory_space<vmem>>, vector<32x1024xbf16>
    %cst_16 = arith.constant dense<0.000000e+00> : vector<2x1024xf32>
    %25 = tpu.matmul %23, %24, %cst_16 {dimension_numbers = #tpu.dot_dimension_numbers<[1], [0], [0], [1], [0, 0, 1, 1], [], []>} : vector<2x32xbf16>, vector<32x1024xbf16>, vector<2x1024xf32> -> vector<2x1024xf32>
    %c0_17 = arith.constant 0 : index
    %c0_18 = arith.constant 0 : index
    %26 = vector.load %arg7[%c0_17, %c0_18] : memref<1x1024xf32, #tpu.memory_space<vmem>>, vector<1x1024xf32>
    %27 = vector.broadcast %26 : vector<1x1024xf32> to vector<2x1024xf32>
    %28 = arith.addf %25, %27 : vector<2x1024xf32>
    %29 = math.tanh %28 : vector<2x1024xf32>
    %c0_19 = arith.constant 0 : index
    %c0_20 = arith.constant 0 : index
    %30 = vector.load %arg8[%c0_19, %c0_20] : memref<2x1024xf32, #tpu.memory_space<vmem>>, vector<2x1024xf32>
    tpu.vector_store %arg8[%c0_19, %c0_20], %29 {strides = array<i32>} : memref<2x1024xf32, #tpu.memory_space<vmem>>, vector<2x1024xf32>,
    %c0_21 = arith.constant 0 : index
    %c0_22 = arith.constant 0 : index
    %31 = vector.load %arg9[%c0_21, %c0_22] : memref<2x32xf32, #tpu.memory_space<vmem>>, vector<2x32xf32>
    tpu.vector_store %arg9[%c0_21, %c0_22], %15 {strides = array<i32>} : memref<2x32xf32, #tpu.memory_space<vmem>>, vector<2x32xf32>,
    %c0_23 = arith.constant 0 : index
    %c0_24 = arith.constant 0 : index
    %32 = vector.load %arg10[%c0_23, %c0_24] : memref<2x32xf32, #tpu.memory_space<vmem>>, vector<2x32xf32>
    tpu.vector_store %arg10[%c0_23, %c0_24], %16 {strides = array<i32>} : memref<2x32xf32, #tpu.memory_space<vmem>>, vector<2x32xf32>,
    return
  }
}

</mosaic_0001>

<llo_original>
// kernel: vae_forward.1
$region0: #{vae_forward.1}
  #allocation0 [shape = 'u32[]', space=smem, size = 0x4, offset = 0x4, fixed_abs, tag = 'smem constant byte address 0x4 - core index']
  #allocation1 [shape = 'u32[72,128]{1,0:T(1,128)}', space=vmem, size = 0x9000, scoped, tag = 'internal scratch']
  %s0 = inlined_call_operand.vmem [shape: f32[2,1024], index: 0, kind: input, shape index: {}]
  %s1 = inlined_call_operand.vmem [shape: f32[2,32], index: 1, kind: input, shape index: {}]
  %s2 = inlined_call_operand.hbm [shape: bf16[1024,512], index: 2, kind: input, shape index: {}]
  %s3 = inlined_call_operand.vmem [shape: f32[1,512], index: 3, kind: input, shape index: {}]
  %s4 = inlined_call_operand.hbm [shape: bf16[512,64], index: 4, kind: input, shape index: {}]
  %s5 = inlined_call_operand.vmem [shape: f32[1,64], index: 5, kind: input, shape index: {}]
  %s6 = inlined_call_operand.vmem [shape: bf16[32,1024], index: 6, kind: input, shape index: {}]
  %s7 = inlined_call_operand.vmem [shape: f32[1,1024], index: 7, kind: input, shape index: {}]
  %s8 = inlined_call_operand.vmem [shape: f32[2,1024], index: 8, kind: output, shape index: {0}]
  %s9 = inlined_call_operand.hbm [shape: f32[2,32], index: 9, kind: output, shape index: {1}]
  %s10 = inlined_call_operand.hbm [shape: f32[2,32], index: 10, kind: output, shape index: {2}]
  %11 = xla_tuple %s8, %s9, %s10
  %s12 = sld [smem:[#allocation0]]
  $region66: #{vae_forward.1} parent=0
    _
  %s14 = ssub.s32 1, %s12
  %s15 = scalar_select 0, %s14, %s12
  $region1: #{vae_forward.1} parent=0
    #allocation2 [shape = 'u8[1048576]{0}', space=vmem, size = 0x100000, scoped, tag = 'input window, operand 2, single buffered']
    #allocation3 [shape = 's32[1]{0}', space=sflag, size = 0x4, scoped, tag = 'scoped memory for vae_forward.1']
    #allocation4 [shape = 's32[1]{0}', space=sflag, size = 0x4, scoped, tag = 'scoped memory for vae_forward.1']
    #allocation5 [shape = 'u8[131072]{0}', space=vmem, size = 0x20000, scoped, tag = 'input window, operand 4, single buffered']
    #allocation6 [shape = 's32[1]{0}', space=sflag, size = 0x4, scoped, tag = 'scoped memory for vae_forward.1']
    #allocation7 [shape = 'u8[1024]{0}', space=vmem, size = 0x400, scoped, tag = 'output window, operand 1, single buffered']
    #allocation8 [shape = 'u8[1024]{0}', space=vmem, size = 0x400, scoped, tag = 'output window, operand 2, single buffered']
    #allocation9 [shape = 's32[1]{0}', space=sflag, size = 0x4, scoped, tag = 'scoped memory for vae_forward.1']
    %16 = vsyncpa [#allocation3], 0
    %17 = vsyncpa [#allocation6], 0
    %18 = vsyncpa [#allocation4], 0
    %19 = vsyncpa [#allocation9], 0
    // Predicated region
    $region2: #{vae_forward.1} parent=1 // pred_check
      _
    $region3: #{vae_forward.1} parent=1 // pred_check_branch
      %21 = sbr.rel (0) target = $region5
    $region4: #{vae_forward.1} parent=1 // pred_region
      _
    $region5: #{vae_forward.1} parent=1 // pred_fallthru
      _
    // Predicated region
    $region6: #{vae_forward.1} parent=1 // pred_check
      _
    $region7: #{vae_forward.1} parent=1 // pred_check_branch
      %23 = sbr.rel (0) target = $region9
    $region8: #{vae_forward.1} parent=1 // pred_region
      _
    $region9: #{vae_forward.1} parent=1 // pred_fallthru
      _
    // Predicated region
    $region10: #{vae_forward.1} parent=1 // pred_check
      _
    $region11: #{vae_forward.1} parent=1 // pred_check_branch
      %25 = sbr.rel (0) target = $region13
    $region12: #{vae_forward.1} parent=1 // pred_region
      %27 = vsyncadd [#allocation3], 0
      %s28 = sshll.u32 %s2, 4
      %s29 = int_to_ptr.hbm [resolvable:$true] %s28
      %s30 = sshll.u32 [#allocation2], 4
      %s31 = int_to_ptr.vmem [resolvable:$true] %s30
      %36 = dma.hbm_to_vmem [thread:$0]  %s29, 32768, %s31, [#allocation3], 256, 256, 16
    $region13: #{vae_forward.1} parent=1 // pred_fallthru
      _
    // Predicated region
    $region14: #{vae_forward.1} parent=1 // pred_check
      _
    $region15: #{vae_forward.1} parent=1 // pred_check_branch
      %38 = sbr.rel (0) target = $region17
    $region16: #{vae_forward.1} parent=1 // pred_region
      _
    $region17: #{vae_forward.1} parent=1 // pred_fallthru
      _
    // Predicated region
    $region18: #{vae_forward.1} parent=1 // pred_check
      _
    $region19: #{vae_forward.1} parent=1 // pred_check_branch
      %40 = sbr.rel (0) target = $region21
    $region20: #{vae_forward.1} parent=1 // pred_region
      %42 = vsyncadd [#allocation6], 0
      %s43 = sshll.u32 %s4, 4
      %s44 = int_to_ptr.hbm [resolvable:$true] %s43
      %s45 = sshll.u32 [#allocation5], 4
      %s46 = int_to_ptr.vmem [resolvable:$true] %s45
      %51 = dma.hbm_to_vmem [thread:$0]  %s44, 4096, %s46, [#allocation6], 64, 64, 4
    $region21: #{vae_forward.1} parent=1 // pred_fallthru
      _
    // Predicated region
    $region22: #{vae_forward.1} parent=1 // pred_check
      _
    $region23: #{vae_forward.1} parent=1 // pred_check_branch
      %53 = sbr.rel (0) target = $region25
    $region24: #{vae_forward.1} parent=1 // pred_region
      _
    $region25: #{vae_forward.1} parent=1 // pred_fallthru
      _
    // Predicated region
    $region26: #{vae_forward.1} parent=1 // pred_check
      _
    $region27: #{vae_forward.1} parent=1 // pred_check_branch
      %55 = sbr.rel (0) target = $region29
    $region28: #{vae_forward.1} parent=1 // pred_region
      _
    $region29: #{vae_forward.1} parent=1 // pred_fallthru
      _
    // Predicated region
    $region30: #{vae_forward.1} parent=1 // pred_check
      _
    $region31: #{vae_forward.1} parent=1 // pred_check_branch
      %57 = sbr.rel (0) target = $region33
    $region32: #{vae_forward.1} parent=1 // pred_region
      _
    $region33: #{vae_forward.1} parent=1 // pred_fallthru
      _
    // Predicated region
    $region34: #{vae_forward.1} parent=1 // pred_check
      _
    $region35: #{vae_forward.1} parent=1 // pred_check_branch
      %59 = sbr.rel (0) target = $region37
    $region36: #{vae_forward.1} parent=1 // pred_region
      %61 = dma.done [#allocation3], 32768
    $region37: #{vae_forward.1} parent=1 // pred_fallthru
      _
    // Predicated region
    $region38: #{vae_forward.1} parent=1 // pred_check
      _
    $region39: #{vae_forward.1} parent=1 // pred_check_branch
      %63 = sbr.rel (0) target = $region41
    $region40: #{vae_forward.1} parent=1 // pred_region
      %65 = dma.done [#allocation6], 4096
    $region41: #{vae_forward.1} parent=1 // pred_fallthru
      _
    %v67 = vld [vmem:[%s0] sm:$0xff]
    %v68 = vld [vmem:[%s0 + $0x8] sm:$0xff]
    %71 = vst [vmem:[#allocation1] ss:$4 sm:$0xff] %v67
    %s72 = scalar_lea.vmem [#allocation1], 32
    %73 = vst [vmem:[%s72] ss:$4 sm:$0xff] %v68
    %v74 = vld.sshfl [vmem:[#allocation1] sm:$0xff pattern:$0x73625140]
    %v75 = vld.sshfl [vmem:[#allocation1 + $0x8] sm:$0xff pattern:$0x73625140]
    %v76 = vld.sshfl [vmem:[#allocation1 + $0x10] sm:$0xff pattern:$0x73625140]
    %v77 = vld.sshfl [vmem:[#allocation1 + $0x18] sm:$0xff pattern:$0x73625140]
    %v78 = vld.sshfl [vmem:[#allocation1 + $0x20] sm:$0xff pattern:$0x73625140]
    %v79 = vld.sshfl [vmem:[#allocation1 + $0x28] sm:$0xff pattern:$0x73625140]
    %v80 = vld.sshfl [vmem:[#allocation1 + $0x30] sm:$0xff pattern:$0x73625140]
    %v81 = vld.sshfl [vmem:[#allocation1 + $0x38] sm:$0xff pattern:$0x73625140]
    %v90 = vpack.c.bf16 %v74, %v74
    %v91 = vpack.c.bf16 %v75, %v75
    %v92 = vpack.c.bf16 %v76, %v76
    %v93 = vpack.c.bf16 %v77, %v77
    %v94 = vpack.c.bf16 %v78, %v78
    %v95 = vpack.c.bf16 %v79, %v79
    %v96 = vpack.c.bf16 %v80, %v80
    %v97 = vpack.c.bf16 %v81, %v81
    %v98 = vld [vmem:[#allocation2] sm:$0xff]
    %v99 = vld [vmem:[#allocation2 + $0x8] sm:$0xff]
    %v100 = vld [vmem:[#allocation2 + $0x10] sm:$0xff]
    %v101 = vld [vmem:[#allocation2 + $0x18] sm:$0xff]
    %v102 = vld [vmem:[#allocation2 + $0x20] sm:$0xff]
    %v103 = vld [vmem:[#allocation2 + $0x28] sm:$0xff]
    %v104 = vld [vmem:[#allocation2 + $0x30] sm:$0xff]
    %v105 = vld [vmem:[#allocation2 + $0x38] sm:$0xff]
    %v106 = vld [vmem:[#allocation2 + $0x40] sm:$0xff]
    %v107 = vld [vmem:[#allocation2 + $0x48] sm:$0xff]
    %v108 = vld [vmem:[#allocation2 + $0x50] sm:$0xff]
    %v109 = vld [vmem:[#allocation2 + $0x58] sm:$0xff]
    %v110 = vld [vmem:[#allocation2 + $0x60] sm:$0xff]
    %v111 = vld [vmem:[#allocation2 + $0x68] sm:$0xff]
    %v112 = vld [vmem:[#allocation2 + $0x70] sm:$0xff]
    %v113 = vld [vmem:[#allocation2 + $0x78] sm:$0xff]
    %v114 = vld [vmem:[#allocation2 + $0x80] sm:$0xff]
    %v115 = vld [vmem:[#allocation2 + $0x88] sm:$0xff]
    %v116 = vld [vmem:[#allocation2 + $0x90] sm:$0xff]
    %v117 = vld [vmem:[#allocation2 + $0x98] sm:$0xff]
    %v118 = vld [vmem:[#allocation2 + $0xa0] sm:$0xff]
    %v119 = vld [vmem:[#allocation2 + $0xa8] sm:$0xff]
    %v120 = vld [vmem:[#allocation2 + $0xb0] sm:$0xff]
    %v121 = vld [vmem:[#allocation2 + $0xb8] sm:$0xff]
    %v122 = vld [vmem:[#allocation2 + $0xc0] sm:$0xff]
    %v123 = vld [vmem:[#allocation2 + $0xc8] sm:$0xff]
    %v124 = vld [vmem:[#allocation2 + $0xd0] sm:$0xff]
    %v125 = vld [vmem:[#allocation2 + $0xd8] sm:$0xff]
    %v126 = vld [vmem:[#allocation2 + $0xe0] sm:$0xff]
    %v127 = vld [vmem:[#allocation2 + $0xe8] sm:$0xff]
    %v128 = vld [vmem:[#allocation2 + $0xf0] sm:$0xff]
    %v129 = vld [vmem:[#allocation2 + $0xf8] sm:$0xff]
    %v130 = vld [vmem:[#allocation2 + $0x100] sm:$0xff]
    %v131 = vld [vmem:[#allocation2 + $0x108] sm:$0xff]
    %v132 = vld [vmem:[#allocation2 + $0x110] sm:$0xff]
    %v133 = vld [vmem:[#allocation2 + $0x118] sm:$0xff]
    %v134 = vld [vmem:[#allocation2 + $0x120] sm:$0xff]
    %v135 = vld [vmem:[#allocation2 + $0x128] sm:$0xff]
    %v136 = vld [vmem:[#allocation2 + $0x130] sm:$0xff]
    %v137 = vld [vmem:[#allocation2 + $0x138] sm:$0xff]
    %v138 = vld [vmem:[#allocation2 + $0x140] sm:$0xff]
    %v139 = vld [vmem:[#allocation2 + $0x148] sm:$0xff]
    %v140 = vld [vmem:[#allocation2 + $0x150] sm:$0xff]
    %v141 = vld [vmem:[#allocation2 + $0x158] sm:$0xff]
    %v142 = vld [vmem:[#allocation2 + $0x160] sm:$0xff]
    %v143 = vld [vmem:[#allocation2 + $0x168] sm:$0xff]
    %v144 = vld [vmem:[#allocation2 + $0x170] sm:$0xff]
    %v145 = vld [vmem:[#allocation2 + $0x178] sm:$0xff]
    %v146 = vld [vmem:[#allocation2 + $0x180] sm:$0xff]
    %v147 = vld [vmem:[#allocation2 + $0x188] sm:$0xff]
    %v148 = vld [vmem:[#allocation2 + $0x190] sm:$0xff]
    %v149 = vld [vmem:[#allocation2 + $0x198] sm:$0xff]
    %v150 = vld [vmem:[#allocation2 + $0x1a0] sm:$0xff]
    %v151 = vld [vmem:[#allocation2 + $0x1a8] sm:$0xff]
    %v152 = vld [vmem:[#allocation2 + $0x1b0] sm:$0xff]
    %v153 = vld [vmem:[#allocation2 + $0x1b8] sm:$0xff]
    %v154 = vld [vmem:[#allocation2 + $0x1c0] sm:$0xff]
    %v155 = vld [vmem:[#allocation2 + $0x1c8] sm:$0xff]
    %v156 = vld [vmem:[#allocation2 + $0x1d0] sm:$0xff]
    %v157 = vld [vmem:[#allocation2 + $0x1d8] sm:$0xff]
    %v158 = vld [vmem:[#allocation2 + $0x1e0] sm:$0xff]
    %v159 = vld [vmem:[#allocation2 + $0x1e8] sm:$0xff]
    %v160 = vld [vmem:[#allocation2 + $0x1f0] sm:$0xff]
    %v161 = vld [vmem:[#allocation2 + $0x1f8] sm:$0xff]
    %v162 = vld [vmem:[#allocation2 + $0x200] sm:$0xff]
    %v163 = vld [vmem:[#allocation2 + $0x208] sm:$0xff]
    %v164 = vld [vmem:[#allocation2 + $0x210] sm:$0xff]
    %v165 = vld [vmem:[#allocation2 + $0x218] sm:$0xff]
    %v166 = vld [vmem:[#allocation2 + $0x220] sm:$0xff]
    %v167 = vld [vmem:[#allocation2 + $0x228] sm:$0xff]
    %v168 = vld [vmem:[#allocation2 + $0x230] sm:$0xff]
    %v169 = vld [vmem:[#allocation2 + $0x238] sm:$0xff]
    %v170 = vld [vmem:[#allocation2 + $0x240] sm:$0xff]
    %v171 = vld [vmem:[#allocation2 + $0x248] sm:$0xff]
    %v172 = vld [vmem:[#allocation2 + $0x250] sm:$0xff]
    %v173 = vld [vmem:[#allocation2 + $0x258] sm:$0xff]
    %v174 = vld [vmem:[#allocation2 + $0x260] sm:$0xff]
    %v175 = vld [vmem:[#allocation2 + $0x268] sm:$0xff]
    %v176 = vld [vmem:[#allocation2 + $0x270] sm:$0xff]
    %v177 = vld [vmem:[#allocation2 + $0x278] sm:$0xff]
    %v178 = vld [vmem:[#allocation2 + $0x280] sm:$0xff]
    %v179 = vld [vmem:[#allocation2 + $0x288] sm:$0xff]
    %v180 = vld [vmem:[#allocation2 + $0x290] sm:$0xff]
    %v181 = vld [vmem:[#allocation2 + $0x298] sm:$0xff]
    %v182 = vld [vmem:[#allocation2 + $0x2a0] sm:$0xff]
    %v183 = vld [vmem:[#allocation2 + $0x2a8] sm:$0xff]
    %v184 = vld [vmem:[#allocation2 + $0x2b0] sm:$0xff]
    %v185 = vld [vmem:[#allocation2 + $0x2b8] sm:$0xff]
    %v186 = vld [vmem:[#allocation2 + $0x2c0] sm:$0xff]
    %v187 = vld [vmem:[#allocation2 + $0x2c8] sm:$0xff]
    %v188 = vld [vmem:[#allocation2 + $0x2d0] sm:$0xff]
    %v189 = vld [vmem:[#allocation2 + $0x2d8] sm:$0xff]
    %v190 = vld [vmem:[#allocation2 + $0x2e0] sm:$0xff]
    %v191 = vld [vmem:[#allocation2 + $0x2e8] sm:$0xff]
    %v192 = vld [vmem:[#allocation2 + $0x2f0] sm:$0xff]
    %v193 = vld [vmem:[#allocation2 + $0x2f8] sm:$0xff]
    %v194 = vld [vmem:[#allocation2 + $0x300] sm:$0xff]
    %v195 = vld [vmem:[#allocation2 + $0x308] sm:$0xff]
    %v196 = vld [vmem:[#allocation2 + $0x310] sm:$0xff]
    %v197 = vld [vmem:[#allocation2 + $0x318] sm:$0xff]
    %v198 = vld [vmem:[#allocation2 + $0x320] sm:$0xff]
    %v199 = vld [vmem:[#allocation2 + $0x328] sm:$0xff]
    %v200 = vld [vmem:[#allocation2 + $0x330] sm:$0xff]
    %v201 = vld [vmem:[#allocation2 + $0x338] sm:$0xff]
    %v202 = vld [vmem:[#allocation2 + $0x340] sm:$0xff]
    %v203 = vld [vmem:[#allocation2 + $0x348] sm:$0xff]
    %v204 = vld [vmem:[#allocation2 + $0x350] sm:$0xff]
    %v205 = vld [vmem:[#allocation2 + $0x358] sm:$0xff]
    %v206 = vld [vmem:[#allocation2 + $0x360] sm:$0xff]
    %v207 = vld [vmem:[#allocation2 + $0x368] sm:$0xff]
    %v208 = vld [vmem:[#allocation2 + $0x370] sm:$0xff]
    %v209 = vld [vmem:[#allocation2 + $0x378] sm:$0xff]
    %v210 = vld [vmem:[#allocation2 + $0x380] sm:$0xff]
    %v211 = vld [vmem:[#allocation2 + $0x388] sm:$0xff]
    %v212 = vld [vmem:[#allocation2 + $0x390] sm:$0xff]
    %v213 = vld [vmem:[#allocation2 + $0x398] sm:$0xff]
    %v214 = vld [vmem:[#allocation2 + $0x3a0] sm:$0xff]
    %v215 = vld [vmem:[#allocation2 + $0x3a8] sm:$0xff]
    %v216 = vld [vmem:[#allocation2 + $0x3b0] sm:$0xff]
    %v217 = vld [vmem:[#allocation2 + $0x3b8] sm:$0xff]
    %v218 = vld [vmem:[#allocation2 + $0x3c0] sm:$0xff]
    %v219 = vld [vmem:[#allocation2 + $0x3c8] sm:$0xff]
    %v220 = vld [vmem:[#allocation2 + $0x3d0] sm:$0xff]
    %v221 = vld [vmem:[#allocation2 + $0x3d8] sm:$0xff]
    %v222 = vld [vmem:[#allocation2 + $0x3e0] sm:$0xff]
    %v223 = vld [vmem:[#allocation2 + $0x3e8] sm:$0xff]
    %v224 = vld [vmem:[#allocation2 + $0x3f0] sm:$0xff]
    %v225 = vld [vmem:[#allocation2 + $0x3f8] sm:$0xff]
    %v226 = vld [vmem:[#allocation2 + $0x400] sm:$0xff]
    %v227 = vld [vmem:[#allocation2 + $0x408] sm:$0xff]
    %v228 = vld [vmem:[#allocation2 + $0x410] sm:$0xff]
    %v229 = vld [vmem:[#allocation2 + $0x418] sm:$0xff]
    %v230 = vld [vmem:[#allocation2 + $0x420] sm:$0xff]
    %v231 = vld [vmem:[#allocation2 + $0x428] sm:$0xff]
    %v232 = vld [vmem:[#allocation2 + $0x430] sm:$0xff]
    %v233 = vld [vmem:[#allocation2 + $0x438] sm:$0xff]
    %v234 = vld [vmem:[#allocation2 + $0x440] sm:$0xff]
    %v235 = vld [vmem:[#allocation2 + $0x448] sm:$0xff]
    %v236 = vld [vmem:[#allocation2 + $0x450] sm:$0xff]
    %v237 = vld [vmem:[#allocation2 + $0x458] sm:$0xff]
    %v238 = vld [vmem:[#allocation2 + $0x460] sm:$0xff]
    %v239 = vld [vmem:[#allocation2 + $0x468] sm:$0xff]
    %v240 = vld [vmem:[#allocation2 + $0x470] sm:$0xff]
    %v241 = vld [vmem:[#allocation2 + $0x478] sm:$0xff]
    %v242 = vld [vmem:[#allocation2 + $0x480] sm:$0xff]
    %v243 = vld [vmem:[#allocation2 + $0x488] sm:$0xff]
    %v244 = vld [vmem:[#allocation2 + $0x490] sm:$0xff]
    %v245 = vld [vmem:[#allocation2 + $0x498] sm:$0xff]
    %v246 = vld [vmem:[#allocation2 + $0x4a0] sm:$0xff]
    %v247 = vld [vmem:[#allocation2 + $0x4a8] sm:$0xff]
    %v248 = vld [vmem:[#allocation2 + $0x4b0] sm:$0xff]
    %v249 = vld [vmem:[#allocation2 + $0x4b8] sm:$0xff]
    %v250 = vld [vmem:[#allocation2 + $0x4c0] sm:$0xff]
    %v251 = vld [vmem:[#allocation2 + $0x4c8] sm:$0xff]
    %v252 = vld [vmem:[#allocation2 + $0x4d0] sm:$0xff]
    %v253 = vld [vmem:[#allocation2 + $0x4d8] sm:$0xff]
    %v254 = vld [vmem:[#allocation2 + $0x4e0] sm:$0xff]
    %v255 = vld [vmem:[#allocation2 + $0x4e8] sm:$0xff]
    %v256 = vld [vmem:[#allocation2 + $0x4f0] sm:$0xff]
    %v257 = vld [vmem:[#allocation2 + $0x4f8] sm:$0xff]
    %v258 = vld [vmem:[#allocation2 + $0x500] sm:$0xff]
    %v259 = vld [vmem:[#allocation2 + $0x508] sm:$0xff]
    %v260 = vld [vmem:[#allocation2 + $0x510] sm:$0xff]
    %v261 = vld [vmem:[#allocation2 + $0x518] sm:$0xff]
    %v262 = vld [vmem:[#allocation2 + $0x520] sm:$0xff]
    %v263 = vld [vmem:[#allocation2 + $0x528] sm:$0xff]
    %v264 = vld [vmem:[#allocation2 + $0x530] sm:$0xff]
    %v265 = vld [vmem:[#allocation2 + $0x538] sm:$0xff]
    %v266 = vld [vmem:[#allocation2 + $0x540] sm:$0xff]
    %v267 = vld [vmem:[#allocation2 + $0x548] sm:$0xff]
    %v268 = vld [vmem:[#allocation2 + $0x550] sm:$0xff]
    %v269 = vld [vmem:[#allocation2 + $0x558] sm:$0xff]
    %v270 = vld [vmem:[#allocation2 + $0x560] sm:$0xff]
    %v271 = vld [vmem:[#allocation2 + $0x568] sm:$0xff]
    %v272 = vld [vmem:[#allocation2 + $0x570] sm:$0xff]
    %v273 = vld [vmem:[#allocation2 + $0x578] sm:$0xff]
    %v274 = vld [vmem:[#allocation2 + $0x580] sm:$0xff]
    %v275 = vld [vmem:[#allocation2 + $0x588] sm:$0xff]
    %v276 = vld [vmem:[#allocation2 + $0x590] sm:$0xff]
    %v277 = vld [vmem:[#allocation2 + $0x598] sm:$0xff]
    %v278 = vld [vmem:[#allocation2 + $0x5a0] sm:$0xff]
    %v279 = vld [vmem:[#allocation2 + $0x5a8] sm:$0xff]
    %v280 = vld [vmem:[#allocation2 + $0x5b0] sm:$0xff]
    %v281 = vld [vmem:[#allocation2 + $0x5b8] sm:$0xff]
    %v282 = vld [vmem:[#allocation2 + $0x5c0] sm:$0xff]
    %v283 = vld [vmem:[#allocation2 + $0x5c8] sm:$0xff]
    %v284 = vld [vmem:[#allocation2 + $0x5d0] sm:$0xff]
    %v285 = vld [vmem:[#allocation2 + $0x5d8] sm:$0xff]
    %v286 = vld [vmem:[#allocation2 + $0x5e0] sm:$0xff]
    %v287 = vld [vmem:[#allocation2 + $0x5e8] sm:$0xff]
    %v288 = vld [vmem:[#allocation2 + $0x5f0] sm:$0xff]
    %v289 = vld [vmem:[#allocation2 + $0x5f8] sm:$0xff]
    %v290 = vld [vmem:[#allocation2 + $0x600] sm:$0xff]
    %v291 = vld [vmem:[#allocation2 + $0x608] sm:$0xff]
    %v292 = vld [vmem:[#allocation2 + $0x610] sm:$0xff]
    %v293 = vld [vmem:[#allocation2 + $0x618] sm:$0xff]
    %v294 = vld [vmem:[#allocation2 + $0x620] sm:$0xff]
    %v295 = vld [vmem:[#allocation2 + $0x628] sm:$0xff]
    %v296 = vld [vmem:[#allocation2 + $0x630] sm:$0xff]
    %v297 = vld [vmem:[#allocation2 + $0x638] sm:$0xff]
    %v298 = vld [vmem:[#allocation2 + $0x640] sm:$0xff]
    %v299 = vld [vmem:[#allocation2 + $0x648] sm:$0xff]
    %v300 = vld [vmem:[#allocation2 + $0x650] sm:$0xff]
    %v301 = vld [vmem:[#allocation2 + $0x658] sm:$0xff]
    %v302 = vld [vmem:[#allocation2 + $0x660] sm:$0xff]
    %v303 = vld [vmem:[#allocation2 + $0x668] sm:$0xff]
    %v304 = vld [vmem:[#allocation2 + $0x670] sm:$0xff]
    %v305 = vld [vmem:[#allocation2 + $0x678] sm:$0xff]
    %v306 = vld [vmem:[#allocation2 + $0x680] sm:$0xff]
    %v307 = vld [vmem:[#allocation2 + $0x688] sm:$0xff]
    %v308 = vld [vmem:[#allocation2 + $0x690] sm:$0xff]
    %v309 = vld [vmem:[#allocation2 + $0x698] sm:$0xff]
    %v310 = vld [vmem:[#allocation2 + $0x6a0] sm:$0xff]
    %v311 = vld [vmem:[#allocation2 + $0x6a8] sm:$0xff]
    %v312 = vld [vmem:[#allocation2 + $0x6b0] sm:$0xff]
    %v313 = vld [vmem:[#allocation2 + $0x6b8] sm:$0xff]
    %v314 = vld [vmem:[#allocation2 + $0x6c0] sm:$0xff]
    %v315 = vld [vmem:[#allocation2 + $0x6c8] sm:$0xff]
    %v316 = vld [vmem:[#allocation2 + $0x6d0] sm:$0xff]
    %v317 = vld [vmem:[#allocation2 + $0x6d8] sm:$0xff]
    %v318 = vld [vmem:[#allocation2 + $0x6e0] sm:$0xff]
    %v319 = vld [vmem:[#allocation2 + $0x6e8] sm:$0xff]
    %v320 = vld [vmem:[#allocation2 + $0x6f0] sm:$0xff]
    %v321 = vld [vmem:[#allocation2 + $0x6f8] sm:$0xff]
    %v322 = vld [vmem:[#allocation2 + $0x700] sm:$0xff]
    %v323 = vld [vmem:[#allocation2 + $0x708] sm:$0xff]
    %v324 = vld [vmem:[#allocation2 + $0x710] sm:$0xff]
    %v325 = vld [vmem:[#allocation2 + $0x718] sm:$0xff]
    %v326 = vld [vmem:[#allocation2 + $0x720] sm:$0xff]
    %v327 = vld [vmem:[#allocation2 + $0x728] sm:$0xff]
    %v328 = vld [vmem:[#allocation2 + $0x730] sm:$0xff]
    %v329 = vld [vmem:[#allocation2 + $0x738] sm:$0xff]
    %v330 = vld [vmem:[#allocation2 + $0x740] sm:$0xff]
    %v331 = vld [vmem:[#allocation2 + $0x748] sm:$0xff]
    %v332 = vld [vmem:[#allocation2 + $0x750] sm:$0xff]
    %v333 = vld [vmem:[#allocation2 + $0x758] sm:$0xff]
    %v334 = vld [vmem:[#allocation2 + $0x760] sm:$0xff]
    %v335 = vld [vmem:[#allocation2 + $0x768] sm:$0xff]
    %v336 = vld [vmem:[#allocation2 + $0x770] sm:$0xff]
    %v337 = vld [vmem:[#allocation2 + $0x778] sm:$0xff]
    %v338 = vld [vmem:[#allocation2 + $0x780] sm:$0xff]
    %v339 = vld [vmem:[#allocation2 + $0x788] sm:$0xff]
    %v340 = vld [vmem:[#allocation2 + $0x790] sm:$0xff]
    %v341 = vld [vmem:[#allocation2 + $0x798] sm:$0xff]
    %v342 = vld [vmem:[#allocation2 + $0x7a0] sm:$0xff]
    %v343 = vld [vmem:[#allocation2 + $0x7a8] sm:$0xff]
    %v344 = vld [vmem:[#allocation2 + $0x7b0] sm:$0xff]
    %v345 = vld [vmem:[#allocation2 + $0x7b8] sm:$0xff]
    %v346 = vld [vmem:[#allocation2 + $0x7c0] sm:$0xff]
    %v347 = vld [vmem:[#allocation2 + $0x7c8] sm:$0xff]
    %v348 = vld [vmem:[#allocation2 + $0x7d0] sm:$0xff]
    %v349 = vld [vmem:[#allocation2 + $0x7d8] sm:$0xff]
    %v350 = vld [vmem:[#allocation2 + $0x7e0] sm:$0xff]
    %v351 = vld [vmem:[#allocation2 + $0x7e8] sm:$0xff]
    %v352 = vld [vmem:[#allocation2 + $0x7f0] sm:$0xff]
    %v353 = vld [vmem:[#allocation2 + $0x7f8] sm:$0xff]
    %v354 = vld [vmem:[%s3] sm:$0xf]
    %v356 = vperm.slane %v354, 0
    %v357 = vperm.slane %v354, 1
    %v358 = vperm.slane %v354, 2
    %v359 = vperm.slane %v354, 3
    %v620 = vunpack.c.l.b16 %v98
    %v621 = vunpack.c.h.b16 %v98
    %v622 = vunpack.c.l.b16 %v99
    %v623 = vunpack.c.h.b16 %v99
    %v624 = vunpack.c.l.b16 %v100
    %v625 = vunpack.c.h.b16 %v100
    %v626 = vunpack.c.l.b16 %v101
    %v627 = vunpack.c.h.b16 %v101
    %v628 = vunpack.c.l.b16 %v102
    %v629 = vunpack.c.h.b16 %v102
    %v630 = vunpack.c.l.b16 %v103
    %v631 = vunpack.c.h.b16 %v103
    %v632 = vunpack.c.l.b16 %v104
    %v633 = vunpack.c.h.b16 %v104
    %v634 = vunpack.c.l.b16 %v105
    %v635 = vunpack.c.h.b16 %v105
    %v636 = vunpack.c.l.b16 %v106
    %v637 = vunpack.c.h.b16 %v106
    %v638 = vunpack.c.l.b16 %v107
    %v639 = vunpack.c.h.b16 %v107
    %v640 = vunpack.c.l.b16 %v108
    %v641 = vunpack.c.h.b16 %v108
    %v642 = vunpack.c.l.b16 %v109
    %v643 = vunpack.c.h.b16 %v109
    %v644 = vunpack.c.l.b16 %v110
    %v645 = vunpack.c.h.b16 %v110
    %v646 = vunpack.c.l.b16 %v111
    %v647 = vunpack.c.h.b16 %v111
    %v648 = vunpack.c.l.b16 %v112
    %v649 = vunpack.c.h.b16 %v112
    %v650 = vunpack.c.l.b16 %v113
    %v651 = vunpack.c.h.b16 %v113
    %v652 = vunpack.c.l.b16 %v114
    %v653 = vunpack.c.h.b16 %v114
    %v654 = vunpack.c.l.b16 %v115
    %v655 = vunpack.c.h.b16 %v115
    %v656 = vunpack.c.l.b16 %v116
    %v657 = vunpack.c.h.b16 %v116
    %v658 = vunpack.c.l.b16 %v117
    %v659 = vunpack.c.h.b16 %v117
    %v660 = vunpack.c.l.b16 %v118
    %v661 = vunpack.c.h.b16 %v118
    %v662 = vunpack.c.l.b16 %v119
    %v663 = vunpack.c.h.b16 %v119
    %v664 = vunpack.c.l.b16 %v120
    %v665 = vunpack.c.h.b16 %v120
    %v666 = vunpack.c.l.b16 %v121
    %v667 = vunpack.c.h.b16 %v121
    %v668 = vunpack.c.l.b16 %v122
    %v669 = vunpack.c.h.b16 %v122
    %v670 = vunpack.c.l.b16 %v123
    %v671 = vunpack.c.h.b16 %v123
    %v672 = vunpack.c.l.b16 %v124
    %v673 = vunpack.c.h.b16 %v124
    %v674 = vunpack.c.l.b16 %v125
    %v675 = vunpack.c.h.b16 %v125
    %v676 = vunpack.c.l.b16 %v126
    %v677 = vunpack.c.h.b16 %v126
    %v678 = vunpack.c.l.b16 %v127
    %v679 = vunpack.c.h.b16 %v127
    %v680 = vunpack.c.l.b16 %v128
    %v681 = vunpack.c.h.b16 %v128
    %v682 = vunpack.c.l.b16 %v129
    %v683 = vunpack.c.h.b16 %v129
    %v684 = vunpack.c.l.b16 %v130
    %v685 = vunpack.c.h.b16 %v130
    %v686 = vunpack.c.l.b16 %v131
    %v687 = vunpack.c.h.b16 %v131
    %v688 = vunpack.c.l.b16 %v132
    %v689 = vunpack.c.h.b16 %v132
    %v690 = vunpack.c.l.b16 %v133
    %v691 = vunpack.c.h.b16 %v133
    %v692 = vunpack.c.l.b16 %v134
    %v693 = vunpack.c.h.b16 %v134
    %v694 = vunpack.c.l.b16 %v135
    %v695 = vunpack.c.h.b16 %v135
    %v696 = vunpack.c.l.b16 %v136
    %v697 = vunpack.c.h.b16 %v136
    %v698 = vunpack.c.l.b16 %v137
    %v699 = vunpack.c.h.b16 %v137
    %v700 = vunpack.c.l.b16 %v138
    %v701 = vunpack.c.h.b16 %v138
    %v702 = vunpack.c.l.b16 %v139
    %v703 = vunpack.c.h.b16 %v139
    %v704 = vunpack.c.l.b16 %v140
    %v705 = vunpack.c.h.b16 %v140
    %v706 = vunpack.c.l.b16 %v141
    %v707 = vunpack.c.h.b16 %v141
    %v708 = vunpack.c.l.b16 %v142
    %v709 = vunpack.c.h.b16 %v142
    %v710 = vunpack.c.l.b16 %v143
    %v711 = vunpack.c.h.b16 %v143
    %v712 = vunpack.c.l.b16 %v144
    %v713 = vunpack.c.h.b16 %v144
    %v714 = vunpack.c.l.b16 %v145
    %v715 = vunpack.c.h.b16 %v145
    %v716 = vunpack.c.l.b16 %v146
    %v717 = vunpack.c.h.b16 %v146
    %v718 = vunpack.c.l.b16 %v147
    %v719 = vunpack.c.h.b16 %v147
    %v720 = vunpack.c.l.b16 %v148
    %v721 = vunpack.c.h.b16 %v148
    %v722 = vunpack.c.l.b16 %v149
    %v723 = vunpack.c.h.b16 %v149
    %v724 = vunpack.c.l.b16 %v150
    %v725 = vunpack.c.h.b16 %v150
    %v726 = vunpack.c.l.b16 %v151
    %v727 = vunpack.c.h.b16 %v151
    %v728 = vunpack.c.l.b16 %v152
    %v729 = vunpack.c.h.b16 %v152
    %v730 = vunpack.c.l.b16 %v153
    %v731 = vunpack.c.h.b16 %v153
    %v732 = vunpack.c.l.b16 %v154
    %v733 = vunpack.c.h.b16 %v154
    %v734 = vunpack.c.l.b16 %v155
    %v735 = vunpack.c.h.b16 %v155
    %v736 = vunpack.c.l.b16 %v156
    %v737 = vunpack.c.h.b16 %v156
    %v738 = vunpack.c.l.b16 %v157
    %v739 = vunpack.c.h.b16 %v157
    %v740 = vunpack.c.l.b16 %v158
    %v741 = vunpack.c.h.b16 %v158
    %v742 = vunpack.c.l.b16 %v159
    %v743 = vunpack.c.h.b16 %v159
    %v744 = vunpack.c.l.b16 %v160
    %v745 = vunpack.c.h.b16 %v160
    %v746 = vunpack.c.l.b16 %v161
    %v747 = vunpack.c.h.b16 %v161
    %v748 = vunpack.c.l.b16 %v162
    %v749 = vunpack.c.h.b16 %v162
    %v750 = vunpack.c.l.b16 %v163
    %v751 = vunpack.c.h.b16 %v163
    %v752 = vunpack.c.l.b16 %v164
    %v753 = vunpack.c.h.b16 %v164
    %v754 = vunpack.c.l.b16 %v165
    %v755 = vunpack.c.h.b16 %v165
    %v756 = vunpack.c.l.b16 %v166
    %v757 = vunpack.c.h.b16 %v166
    %v758 = vunpack.c.l.b16 %v167
    %v759 = vunpack.c.h.b16 %v167
    %v760 = vunpack.c.l.b16 %v168
    %v761 = vunpack.c.h.b16 %v168
    %v762 = vunpack.c.l.b16 %v169
    %v763 = vunpack.c.h.b16 %v169
    %v764 = vunpack.c.l.b16 %v170
    %v765 = vunpack.c.h.b16 %v170
    %v766 = vunpack.c.l.b16 %v171
    %v767 = vunpack.c.h.b16 %v171
    %v768 = vunpack.c.l.b16 %v172
    %v769 = vunpack.c.h.b16 %v172
    %v770 = vunpack.c.l.b16 %v173
    %v771 = vunpack.c.h.b16 %v173
    %v772 = vunpack.c.l.b16 %v174
    %v773 = vunpack.c.h.b16 %v174
    %v774 = vunpack.c.l.b16 %v175
    %v775 = vunpack.c.h.b16 %v175
    %v776 = vunpack.c.l.b16 %v176
    %v777 = vunpack.c.h.b16 %v176
    %v778 = vunpack.c.l.b16 %v177
    %v779 = vunpack.c.h.b16 %v177
    %v780 = vunpack.c.l.b16 %v178
    %v781 = vunpack.c.h.b16 %v178
    %v782 = vunpack.c.l.b16 %v179
    %v783 = vunpack.c.h.b16 %v179
    %v784 = vunpack.c.l.b16 %v180
    %v785 = vunpack.c.h.b16 %v180
    %v786 = vunpack.c.l.b16 %v181
    %v787 = vunpack.c.h.b16 %v181
    %v788 = vunpack.c.l.b16 %v182
    %v789 = vunpack.c.h.b16 %v182
    %v790 = vunpack.c.l.b16 %v183
    %v791 = vunpack.c.h.b16 %v183
    %v792 = vunpack.c.l.b16 %v184
    %v793 = vunpack.c.h.b16 %v184
    %v794 = vunpack.c.l.b16 %v185
    %v795 = vunpack.c.h.b16 %v185
    %v796 = vunpack.c.l.b16 %v186
    %v797 = vunpack.c.h.b16 %v186
    %v798 = vunpack.c.l.b16 %v187
    %v799 = vunpack.c.h.b16 %v187
    %v800 = vunpack.c.l.b16 %v188
    %v801 = vunpack.c.h.b16 %v188
    %v802 = vunpack.c.l.b16 %v189
    %v803 = vunpack.c.h.b16 %v189
    %v804 = vunpack.c.l.b16 %v190
    %v805 = vunpack.c.h.b16 %v190
    %v806 = vunpack.c.l.b16 %v191
    %v807 = vunpack.c.h.b16 %v191
    %v808 = vunpack.c.l.b16 %v192
    %v809 = vunpack.c.h.b16 %v192
    %v810 = vunpack.c.l.b16 %v193
    %v811 = vunpack.c.h.b16 %v193
    %v812 = vunpack.c.l.b16 %v194
    %v813 = vunpack.c.h.b16 %v194
    %v814 = vunpack.c.l.b16 %v195
    %v815 = vunpack.c.h.b16 %v195
    %v816 = vunpack.c.l.b16 %v196
    %v817 = vunpack.c.h.b16 %v196
    %v818 = vunpack.c.l.b16 %v197
    %v819 = vunpack.c.h.b16 %v197
    %v820 = vunpack.c.l.b16 %v198
    %v821 = vunpack.c.h.b16 %v198
    %v822 = vunpack.c.l.b16 %v199
    %v823 = vunpack.c.h.b16 %v199
    %v824 = vunpack.c.l.b16 %v200
    %v825 = vunpack.c.h.b16 %v200
    %v826 = vunpack.c.l.b16 %v201
    %v827 = vunpack.c.h.b16 %v201
    %v828 = vunpack.c.l.b16 %v202
    %v829 = vunpack.c.h.b16 %v202
    %v830 = vunpack.c.l.b16 %v203
    %v831 = vunpack.c.h.b16 %v203
    %v832 = vunpack.c.l.b16 %v204
    %v833 = vunpack.c.h.b16 %v204
    %v834 = vunpack.c.l.b16 %v205
    %v835 = vunpack.c.h.b16 %v205
    %v836 = vunpack.c.l.b16 %v206
    %v837 = vunpack.c.h.b16 %v206
    %v838 = vunpack.c.l.b16 %v207
    %v839 = vunpack.c.h.b16 %v207
    %v840 = vunpack.c.l.b16 %v208
    %v841 = vunpack.c.h.b16 %v208
    %v842 = vunpack.c.l.b16 %v209
    %v843 = vunpack.c.h.b16 %v209
    %v844 = vunpack.c.l.b16 %v210
    %v845 = vunpack.c.h.b16 %v210
    %v846 = vunpack.c.l.b16 %v211
    %v847 = vunpack.c.h.b16 %v211
    %v848 = vunpack.c.l.b16 %v212
    %v849 = vunpack.c.h.b16 %v212
    %v850 = vunpack.c.l.b16 %v213
    %v851 = vunpack.c.h.b16 %v213
    %v852 = vunpack.c.l.b16 %v214
    %v853 = vunpack.c.h.b16 %v214
    %v854 = vunpack.c.l.b16 %v215
    %v855 = vunpack.c.h.b16 %v215
    %v856 = vunpack.c.l.b16 %v216
    %v857 = vunpack.c.h.b16 %v216
    %v858 = vunpack.c.l.b16 %v217
    %v859 = vunpack.c.h.b16 %v217
    %v860 = vunpack.c.l.b16 %v218
    %v861 = vunpack.c.h.b16 %v218
    %v862 = vunpack.c.l.b16 %v219
    %v863 = vunpack.c.h.b16 %v219
    %v864 = vunpack.c.l.b16 %v220
    %v865 = vunpack.c.h.b16 %v220
    %v866 = vunpack.c.l.b16 %v221
    %v867 = vunpack.c.h.b16 %v221
    %v868 = vunpack.c.l.b16 %v222
    %v869 = vunpack.c.h.b16 %v222
    %v870 = vunpack.c.l.b16 %v223
    %v871 = vunpack.c.h.b16 %v223
    %v872 = vunpack.c.l.b16 %v224
    %v873 = vunpack.c.h.b16 %v224
    %v874 = vunpack.c.l.b16 %v225
    %v875 = vunpack.c.h.b16 %v225
    %v876 = vunpack.c.l.b16 %v226
    %v877 = vunpack.c.h.b16 %v226
    %v878 = vunpack.c.l.b16 %v227
    %v879 = vunpack.c.h.b16 %v227
    %v880 = vunpack.c.l.b16 %v228
    %v881 = vunpack.c.h.b16 %v228
    %v882 = vunpack.c.l.b16 %v229
    %v883 = vunpack.c.h.b16 %v229
    %v884 = vunpack.c.l.b16 %v230
    %v885 = vunpack.c.h.b16 %v230
    %v886 = vunpack.c.l.b16 %v231
    %v887 = vunpack.c.h.b16 %v231
    %v888 = vunpack.c.l.b16 %v232
    %v889 = vunpack.c.h.b16 %v232
    %v890 = vunpack.c.l.b16 %v233
    %v891 = vunpack.c.h.b16 %v233
    %v892 = vunpack.c.l.b16 %v234
    %v893 = vunpack.c.h.b16 %v234
    %v894 = vunpack.c.l.b16 %v235
    %v895 = vunpack.c.h.b16 %v235
    %v896 = vunpack.c.l.b16 %v236
    %v897 = vunpack.c.h.b16 %v236
    %v898 = vunpack.c.l.b16 %v237
    %v899 = vunpack.c.h.b16 %v237
    %v900 = vunpack.c.l.b16 %v238
    %v901 = vunpack.c.h.b16 %v238
    %v902 = vunpack.c.l.b16 %v239
    %v903 = vunpack.c.h.b16 %v239
    %v904 = vunpack.c.l.b16 %v240
    %v905 = vunpack.c.h.b16 %v240
    %v906 = vunpack.c.l.b16 %v241
    %v907 = vunpack.c.h.b16 %v241
    %v908 = vunpack.c.l.b16 %v242
    %v909 = vunpack.c.h.b16 %v242
    %v910 = vunpack.c.l.b16 %v243
    %v911 = vunpack.c.h.b16 %v243
    %v912 = vunpack.c.l.b16 %v244
    %v913 = vunpack.c.h.b16 %v244
    %v914 = vunpack.c.l.b16 %v245
    %v915 = vunpack.c.h.b16 %v245
    %v916 = vunpack.c.l.b16 %v246
    %v917 = vunpack.c.h.b16 %v246
    %v918 = vunpack.c.l.b16 %v247
    %v919 = vunpack.c.h.b16 %v247
    %v920 = vunpack.c.l.b16 %v248
    %v921 = vunpack.c.h.b16 %v248
    %v922 = vunpack.c.l.b16 %v249
    %v923 = vunpack.c.h.b16 %v249
    %v924 = vunpack.c.l.b16 %v250
    %v925 = vunpack.c.h.b16 %v250
    %v926 = vunpack.c.l.b16 %v251
    %v927 = vunpack.c.h.b16 %v251
    %v928 = vunpack.c.l.b16 %v252
    %v929 = vunpack.c.h.b16 %v252
    %v930 = vunpack.c.l.b16 %v253
    %v931 = vunpack.c.h.b16 %v253
    %v932 = vunpack.c.l.b16 %v254
    %v933 = vunpack.c.h.b16 %v254
    %v934 = vunpack.c.l.b16 %v255
    %v935 = vunpack.c.h.b16 %v255
    %v936 = vunpack.c.l.b16 %v256
    %v937 = vunpack.c.h.b16 %v256
    %v938 = vunpack.c.l.b16 %v257
    %v939 = vunpack.c.h.b16 %v257
    %v940 = vunpack.c.l.b16 %v258
    %v941 = vunpack.c.h.b16 %v258
    %v942 = vunpack.c.l.b16 %v259
    %v943 = vunpack.c.h.b16 %v259
    %v944 = vunpack.c.l.b16 %v260
    %v945 = vunpack.c.h.b16 %v260
    %v946 = vunpack.c.l.b16 %v261
    %v947 = vunpack.c.h.b16 %v261
    %v948 = vunpack.c.l.b16 %v262
    %v949 = vunpack.c.h.b16 %v262
    %v950 = vunpack.c.l.b16 %v263
    %v951 = vunpack.c.h.b16 %v263
    %v952 = vunpack.c.l.b16 %v264
    %v953 = vunpack.c.h.b16 %v264
    %v954 = vunpack.c.l.b16 %v265
    %v955 = vunpack.c.h.b16 %v265
    %v956 = vunpack.c.l.b16 %v266
    %v957 = vunpack.c.h.b16 %v266
    %v958 = vunpack.c.l.b16 %v267
    %v959 = vunpack.c.h.b16 %v267
    %v960 = vunpack.c.l.b16 %v268
    %v961 = vunpack.c.h.b16 %v268
    %v962 = vunpack.c.l.b16 %v269
    %v963 = vunpack.c.h.b16 %v269
    %v964 = vunpack.c.l.b16 %v270
    %v965 = vunpack.c.h.b16 %v270
    %v966 = vunpack.c.l.b16 %v271
    %v967 = vunpack.c.h.b16 %v271
    %v968 = vunpack.c.l.b16 %v272
    %v969 = vunpack.c.h.b16 %v272
    %v970 = vunpack.c.l.b16 %v273
    %v971 = vunpack.c.h.b16 %v273
    %v972 = vunpack.c.l.b16 %v274
    %v973 = vunpack.c.h.b16 %v274
    %v974 = vunpack.c.l.b16 %v275
    %v975 = vunpack.c.h.b16 %v275
    %v976 = vunpack.c.l.b16 %v276
    %v977 = vunpack.c.h.b16 %v276
    %v978 = vunpack.c.l.b16 %v277
    %v979 = vunpack.c.h.b16 %v277
    %v980 = vunpack.c.l.b16 %v278
    %v981 = vunpack.c.h.b16 %v278
    %v982 = vunpack.c.l.b16 %v279
    %v983 = vunpack.c.h.b16 %v279
    %v984 = vunpack.c.l.b16 %v280
    %v985 = vunpack.c.h.b16 %v280
    %v986 = vunpack.c.l.b16 %v281
    %v987 = vunpack.c.h.b16 %v281
    %v988 = vunpack.c.l.b16 %v282
    %v989 = vunpack.c.h.b16 %v282
    %v990 = vunpack.c.l.b16 %v283
    %v991 = vunpack.c.h.b16 %v283
    %v992 = vunpack.c.l.b16 %v284
    %v993 = vunpack.c.h.b16 %v284
    %v994 = vunpack.c.l.b16 %v285
    %v995 = vunpack.c.h.b16 %v285
    %v996 = vunpack.c.l.b16 %v286
    %v997 = vunpack.c.h.b16 %v286
    %v998 = vunpack.c.l.b16 %v287
    %v999 = vunpack.c.h.b16 %v287
    %v1000 = vunpack.c.l.b16 %v288
    %v1001 = vunpack.c.h.b16 %v288
    %v1002 = vunpack.c.l.b16 %v289
    %v1003 = vunpack.c.h.b16 %v289
    %v1004 = vunpack.c.l.b16 %v290
    %v1005 = vunpack.c.h.b16 %v290
    %v1006 = vunpack.c.l.b16 %v291
    %v1007 = vunpack.c.h.b16 %v291
    %v1008 = vunpack.c.l.b16 %v292
    %v1009 = vunpack.c.h.b16 %v292
    %v1010 = vunpack.c.l.b16 %v293
    %v1011 = vunpack.c.h.b16 %v293
    %v1012 = vunpack.c.l.b16 %v294
    %v1013 = vunpack.c.h.b16 %v294
    %v1014 = vunpack.c.l.b16 %v295
    %v1015 = vunpack.c.h.b16 %v295
    %v1016 = vunpack.c.l.b16 %v296
    %v1017 = vunpack.c.h.b16 %v296
    %v1018 = vunpack.c.l.b16 %v297
    %v1019 = vunpack.c.h.b16 %v297
    %v1020 = vunpack.c.l.b16 %v298
    %v1021 = vunpack.c.h.b16 %v298
    %v1022 = vunpack.c.l.b16 %v299
    %v1023 = vunpack.c.h.b16 %v299
    %v1024 = vunpack.c.l.b16 %v300
    %v1025 = vunpack.c.h.b16 %v300
    %v1026 = vunpack.c.l.b16 %v301
    %v1027 = vunpack.c.h.b16 %v301
    %v1028 = vunpack.c.l.b16 %v302
    %v1029 = vunpack.c.h.b16 %v302
    %v1030 = vunpack.c.l.b16 %v303
    %v1031 = vunpack.c.h.b16 %v303
    %v1032 = vunpack.c.l.b16 %v304
    %v1033 = vunpack.c.h.b16 %v304
    %v1034 = vunpack.c.l.b16 %v305
    %v1035 = vunpack.c.h.b16 %v305
    %v1036 = vunpack.c.l.b16 %v306
    %v1037 = vunpack.c.h.b16 %v306
    %v1038 = vunpack.c.l.b16 %v307
    %v1039 = vunpack.c.h.b16 %v307
    %v1040 = vunpack.c.l.b16 %v308
    %v1041 = vunpack.c.h.b16 %v308
    %v1042 = vunpack.c.l.b16 %v309
    %v1043 = vunpack.c.h.b16 %v309
    %v1044 = vunpack.c.l.b16 %v310
    %v1045 = vunpack.c.h.b16 %v310
    %v1046 = vunpack.c.l.b16 %v311
    %v1047 = vunpack.c.h.b16 %v311
    %v1048 = vunpack.c.l.b16 %v312
    %v1049 = vunpack.c.h.b16 %v312
    %v1050 = vunpack.c.l.b16 %v313
    %v1051 = vunpack.c.h.b16 %v313
    %v1052 = vunpack.c.l.b16 %v314
    %v1053 = vunpack.c.h.b16 %v314
    %v1054 = vunpack.c.l.b16 %v315
    %v1055 = vunpack.c.h.b16 %v315
    %v1056 = vunpack.c.l.b16 %v316
    %v1057 = vunpack.c.h.b16 %v316
    %v1058 = vunpack.c.l.b16 %v317
    %v1059 = vunpack.c.h.b16 %v317
    %v1060 = vunpack.c.l.b16 %v318
    %v1061 = vunpack.c.h.b16 %v318
    %v1062 = vunpack.c.l.b16 %v319
    %v1063 = vunpack.c.h.b16 %v319
    %v1064 = vunpack.c.l.b16 %v320
    %v1065 = vunpack.c.h.b16 %v320
    %v1066 = vunpack.c.l.b16 %v321
    %v1067 = vunpack.c.h.b16 %v321
    %v1068 = vunpack.c.l.b16 %v322
    %v1069 = vunpack.c.h.b16 %v322
    %v1070 = vunpack.c.l.b16 %v323
    %v1071 = vunpack.c.h.b16 %v323
    %v1072 = vunpack.c.l.b16 %v324
    %v1073 = vunpack.c.h.b16 %v324
    %v1074 = vunpack.c.l.b16 %v325
    %v1075 = vunpack.c.h.b16 %v325
    %v1076 = vunpack.c.l.b16 %v326
    %v1077 = vunpack.c.h.b16 %v326
    %v1078 = vunpack.c.l.b16 %v327
    %v1079 = vunpack.c.h.b16 %v327
    %v1080 = vunpack.c.l.b16 %v328
    %v1081 = vunpack.c.h.b16 %v328
    %v1082 = vunpack.c.l.b16 %v329
    %v1083 = vunpack.c.h.b16 %v329
    %v1084 = vunpack.c.l.b16 %v330
    %v1085 = vunpack.c.h.b16 %v330
    %v1086 = vunpack.c.l.b16 %v331
    %v1087 = vunpack.c.h.b16 %v331
    %v1088 = vunpack.c.l.b16 %v332
    %v1089 = vunpack.c.h.b16 %v332
    %v1090 = vunpack.c.l.b16 %v333
    %v1091 = vunpack.c.h.b16 %v333
    %v1092 = vunpack.c.l.b16 %v334
    %v1093 = vunpack.c.h.b16 %v334
    %v1094 = vunpack.c.l.b16 %v335
    %v1095 = vunpack.c.h.b16 %v335
    %v1096 = vunpack.c.l.b16 %v336
    %v1097 = vunpack.c.h.b16 %v336
    %v1098 = vunpack.c.l.b16 %v337
    %v1099 = vunpack.c.h.b16 %v337
    %v1100 = vunpack.c.l.b16 %v338
    %v1101 = vunpack.c.h.b16 %v338
    %v1102 = vunpack.c.l.b16 %v339
    %v1103 = vunpack.c.h.b16 %v339
    %v1104 = vunpack.c.l.b16 %v340
    %v1105 = vunpack.c.h.b16 %v340
    %v1106 = vunpack.c.l.b16 %v341
    %v1107 = vunpack.c.h.b16 %v341
    %v1108 = vunpack.c.l.b16 %v342
    %v1109 = vunpack.c.h.b16 %v342
    %v1110 = vunpack.c.l.b16 %v343
    %v1111 = vunpack.c.h.b16 %v343
    %v1112 = vunpack.c.l.b16 %v344
    %v1113 = vunpack.c.h.b16 %v344
    %v1114 = vunpack.c.l.b16 %v345
    %v1115 = vunpack.c.h.b16 %v345
    %v1116 = vunpack.c.l.b16 %v346
    %v1117 = vunpack.c.h.b16 %v346
    %v1118 = vunpack.c.l.b16 %v347
    %v1119 = vunpack.c.h.b16 %v347
    %v1120 = vunpack.c.l.b16 %v348
    %v1121 = vunpack.c.h.b16 %v348
    %v1122 = vunpack.c.l.b16 %v349
    %v1123 = vunpack.c.h.b16 %v349
    %v1124 = vunpack.c.l.b16 %v350
    %v1125 = vunpack.c.h.b16 %v350
    %v1126 = vunpack.c.l.b16 %v351
    %v1127 = vunpack.c.h.b16 %v351
    %v1128 = vunpack.c.l.b16 %v352
    %v1129 = vunpack.c.h.b16 %v352
    %v1130 = vunpack.c.l.b16 %v353
    %v1131 = vunpack.c.h.b16 %v353
    %v1132 = vpack.c.b16 %v624, %v620
    %v1133 = vpack.c.b16 %v625, %v621
    %v1134 = vpack.c.b16 %v626, %v622
    %v1135 = vpack.c.b16 %v627, %v623
    %v1136 = vpack.c.b16 %v632, %v628
    %v1137 = vpack.c.b16 %v633, %v629
    %v1138 = vpack.c.b16 %v634, %v630
    %v1139 = vpack.c.b16 %v635, %v631
    %v1140 = vpack.c.b16 %v640, %v636
    %v1141 = vpack.c.b16 %v641, %v637
    %v1142 = vpack.c.b16 %v642, %v638
    %v1143 = vpack.c.b16 %v643, %v639
    %v1144 = vpack.c.b16 %v648, %v644
    %v1145 = vpack.c.b16 %v649, %v645
    %v1146 = vpack.c.b16 %v650, %v646
    %v1147 = vpack.c.b16 %v651, %v647
    %v1148 = vpack.c.b16 %v656, %v652
    %v1149 = vpack.c.b16 %v657, %v653
    %v1150 = vpack.c.b16 %v658, %v654
    %v1151 = vpack.c.b16 %v659, %v655
    %v1152 = vpack.c.b16 %v664, %v660
    %v1153 = vpack.c.b16 %v665, %v661
    %v1154 = vpack.c.b16 %v666, %v662
    %v1155 = vpack.c.b16 %v667, %v663
    %v1156 = vpack.c.b16 %v672, %v668
    %v1157 = vpack.c.b16 %v673, %v669
    %v1158 = vpack.c.b16 %v674, %v670
    %v1159 = vpack.c.b16 %v675, %v671
    %v1160 = vpack.c.b16 %v680, %v676
    %v1161 = vpack.c.b16 %v681, %v677
    %v1162 = vpack.c.b16 %v682, %v678
    %v1163 = vpack.c.b16 %v683, %v679
    %v1164 = vpack.c.b16 %v688, %v684
    %v1165 = vpack.c.b16 %v689, %v685
    %v1166 = vpack.c.b16 %v690, %v686
    %v1167 = vpack.c.b16 %v691, %v687
    %v1168 = vpack.c.b16 %v696, %v692
    %v1169 = vpack.c.b16 %v697, %v693
    %v1170 = vpack.c.b16 %v698, %v694
    %v1171 = vpack.c.b16 %v699, %v695
    %v1172 = vpack.c.b16 %v704, %v700
    %v1173 = vpack.c.b16 %v705, %v701
    %v1174 = vpack.c.b16 %v706, %v702
    %v1175 = vpack.c.b16 %v707, %v703
    %v1176 = vpack.c.b16 %v712, %v708
    %v1177 = vpack.c.b16 %v713, %v709
    %v1178 = vpack.c.b16 %v714, %v710
    %v1179 = vpack.c.b16 %v715, %v711
    %v1180 = vpack.c.b16 %v720, %v716
    %v1181 = vpack.c.b16 %v721, %v717
    %v1182 = vpack.c.b16 %v722, %v718
    %v1183 = vpack.c.b16 %v723, %v719
    %v1184 = vpack.c.b16 %v728, %v724
    %v1185 = vpack.c.b16 %v729, %v725
    %v1186 = vpack.c.b16 %v730, %v726
    %v1187 = vpack.c.b16 %v731, %v727
    %v1188 = vpack.c.b16 %v736, %v732
    %v1189 = vpack.c.b16 %v737, %v733
    %v1190 = vpack.c.b16 %v738, %v734
    %v1191 = vpack.c.b16 %v739, %v735
    %v1192 = vpack.c.b16 %v744, %v740
    %v1193 = vpack.c.b16 %v745, %v741
    %v1194 = vpack.c.b16 %v746, %v742
    %v1195 = vpack.c.b16 %v747, %v743
    %v1196 = vpack.c.b16 %v752, %v748
    %v1197 = vpack.c.b16 %v753, %v749
    %v1198 = vpack.c.b16 %v754, %v750
    %v1199 = vpack.c.b16 %v755, %v751
    %v1200 = vpack.c.b16 %v760, %v756
    %v1201 = vpack.c.b16 %v761, %v757
    %v1202 = vpack.c.b16 %v762, %v758
    %v1203 = vpack.c.b16 %v763, %v759
    %v1204 = vpack.c.b16 %v768, %v764
    %v1205 = vpack.c.b16 %v769, %v765
    %v1206 = vpack.c.b16 %v770, %v766
    %v1207 = vpack.c.b16 %v771, %v767
    %v1208 = vpack.c.b16 %v776, %v772
    %v1209 = vpack.c.b16 %v777, %v773
    %v1210 = vpack.c.b16 %v778, %v774
    %v1211 = vpack.c.b16 %v779, %v775
    %v1212 = vpack.c.b16 %v784, %v780
    %v1213 = vpack.c.b16 %v785, %v781
    %v1214 = vpack.c.b16 %v786, %v782
    %v1215 = vpack.c.b16 %v787, %v783
    %v1216 = vpack.c.b16 %v792, %v788
    %v1217 = vpack.c.b16 %v793, %v789
    %v1218 = vpack.c.b16 %v794, %v790
    %v1219 = vpack.c.b16 %v795, %v791
    %v1220 = vpack.c.b16 %v800, %v796
    %v1221 = vpack.c.b16 %v801, %v797
    %v1222 = vpack.c.b16 %v802, %v798
    %v1223 = vpack.c.b16 %v803, %v799
    %v1224 = vpack.c.b16 %v808, %v804
    %v1225 = vpack.c.b16 %v809, %v805
    %v1226 = vpack.c.b16 %v810, %v806
    %v1227 = vpack.c.b16 %v811, %v807
    %v1228 = vpack.c.b16 %v816, %v812
    %v1229 = vpack.c.b16 %v817, %v813
    %v1230 = vpack.c.b16 %v818, %v814
    %v1231 = vpack.c.b16 %v819, %v815
    %v1232 = vpack.c.b16 %v824, %v820
    %v1233 = vpack.c.b16 %v825, %v821
    %v1234 = vpack.c.b16 %v826, %v822
    %v1235 = vpack.c.b16 %v827, %v823
    %v1236 = vpack.c.b16 %v832, %v828
    %v1237 = vpack.c.b16 %v833, %v829
    %v1238 = vpack.c.b16 %v834, %v830
    %v1239 = vpack.c.b16 %v835, %v831
    %v1240 = vpack.c.b16 %v840, %v836
    %v1241 = vpack.c.b16 %v841, %v837
    %v1242 = vpack.c.b16 %v842, %v838
    %v1243 = vpack.c.b16 %v843, %v839
    %v1244 = vpack.c.b16 %v848, %v844
    %v1245 = vpack.c.b16 %v849, %v845
    %v1246 = vpack.c.b16 %v850, %v846
    %v1247 = vpack.c.b16 %v851, %v847
    %v1248 = vpack.c.b16 %v856, %v852
    %v1249 = vpack.c.b16 %v857, %v853
    %v1250 = vpack.c.b16 %v858, %v854
    %v1251 = vpack.c.b16 %v859, %v855
    %v1252 = vpack.c.b16 %v864, %v860
    %v1253 = vpack.c.b16 %v865, %v861
    %v1254 = vpack.c.b16 %v866, %v862
    %v1255 = vpack.c.b16 %v867, %v863
    %v1256 = vpack.c.b16 %v872, %v868
    %v1257 = vpack.c.b16 %v873, %v869
    %v1258 = vpack.c.b16 %v874, %v870
    %v1259 = vpack.c.b16 %v875, %v871
    %v1260 = vpack.c.b16 %v880, %v876
    %v1261 = vpack.c.b16 %v881, %v877
    %v1262 = vpack.c.b16 %v882, %v878
    %v1263 = vpack.c.b16 %v883, %v879
    %v1264 = vpack.c.b16 %v888, %v884
    %v1265 = vpack.c.b16 %v889, %v885
    %v1266 = vpack.c.b16 %v890, %v886
    %v1267 = vpack.c.b16 %v891, %v887
    %v1268 = vpack.c.b16 %v896, %v892
    %v1269 = vpack.c.b16 %v897, %v893
    %v1270 = vpack.c.b16 %v898, %v894
    %v1271 = vpack.c.b16 %v899, %v895
    %v1272 = vpack.c.b16 %v904, %v900
    %v1273 = vpack.c.b16 %v905, %v901
    %v1274 = vpack.c.b16 %v906, %v902
    %v1275 = vpack.c.b16 %v907, %v903
    %v1276 = vpack.c.b16 %v912, %v908
    %v1277 = vpack.c.b16 %v913, %v909
    %v1278 = vpack.c.b16 %v914, %v910
    %v1279 = vpack.c.b16 %v915, %v911
    %v1280 = vpack.c.b16 %v920, %v916
    %v1281 = vpack.c.b16 %v921, %v917
    %v1282 = vpack.c.b16 %v922, %v918
    %v1283 = vpack.c.b16 %v923, %v919
    %v1284 = vpack.c.b16 %v928, %v924
    %v1285 = vpack.c.b16 %v929, %v925
    %v1286 = vpack.c.b16 %v930, %v926
    %v1287 = vpack.c.b16 %v931, %v927
    %v1288 = vpack.c.b16 %v936, %v932
    %v1289 = vpack.c.b16 %v937, %v933
    %v1290 = vpack.c.b16 %v938, %v934
    %v1291 = vpack.c.b16 %v939, %v935
    %v1292 = vpack.c.b16 %v944, %v940
    %v1293 = vpack.c.b16 %v945, %v941
    %v1294 = vpack.c.b16 %v946, %v942
    %v1295 = vpack.c.b16 %v947, %v943
    %v1296 = vpack.c.b16 %v952, %v948
    %v1297 = vpack.c.b16 %v953, %v949
    %v1298 = vpack.c.b16 %v954, %v950
    %v1299 = vpack.c.b16 %v955, %v951
    %v1300 = vpack.c.b16 %v960, %v956
    %v1301 = vpack.c.b16 %v961, %v957
    %v1302 = vpack.c.b16 %v962, %v958
    %v1303 = vpack.c.b16 %v963, %v959
    %v1304 = vpack.c.b16 %v968, %v964
    %v1305 = vpack.c.b16 %v969, %v965
    %v1306 = vpack.c.b16 %v970, %v966
    %v1307 = vpack.c.b16 %v971, %v967
    %v1308 = vpack.c.b16 %v976, %v972
    %v1309 = vpack.c.b16 %v977, %v973
    %v1310 = vpack.c.b16 %v978, %v974
    %v1311 = vpack.c.b16 %v979, %v975
    %v1312 = vpack.c.b16 %v984, %v980
    %v1313 = vpack.c.b16 %v985, %v981
    %v1314 = vpack.c.b16 %v986, %v982
    %v1315 = vpack.c.b16 %v987, %v983
    %v1316 = vpack.c.b16 %v992, %v988
    %v1317 = vpack.c.b16 %v993, %v989
    %v1318 = vpack.c.b16 %v994, %v990
    %v1319 = vpack.c.b16 %v995, %v991
    %v1320 = vpack.c.b16 %v1000, %v996
    %v1321 = vpack.c.b16 %v1001, %v997
    %v1322 = vpack.c.b16 %v1002, %v998
    %v1323 = vpack.c.b16 %v1003, %v999
    %v1324 = vpack.c.b16 %v1008, %v1004
    %v1325 = vpack.c.b16 %v1009, %v1005
    %v1326 = vpack.c.b16 %v1010, %v1006
    %v1327 = vpack.c.b16 %v1011, %v1007
    %v1328 = vpack.c.b16 %v1016, %v1012
    %v1329 = vpack.c.b16 %v1017, %v1013
    %v1330 = vpack.c.b16 %v1018, %v1014
    %v1331 = vpack.c.b16 %v1019, %v1015
    %v1332 = vpack.c.b16 %v1024, %v1020
    %v1333 = vpack.c.b16 %v1025, %v1021
    %v1334 = vpack.c.b16 %v1026, %v1022
    %v1335 = vpack.c.b16 %v1027, %v1023
    %v1336 = vpack.c.b16 %v1032, %v1028
    %v1337 = vpack.c.b16 %v1033, %v1029
    %v1338 = vpack.c.b16 %v1034, %v1030
    %v1339 = vpack.c.b16 %v1035, %v1031
    %v1340 = vpack.c.b16 %v1040, %v1036
    %v1341 = vpack.c.b16 %v1041, %v1037
    %v1342 = vpack.c.b16 %v1042, %v1038
    %v1343 = vpack.c.b16 %v1043, %v1039
    %v1344 = vpack.c.b16 %v1048, %v1044
    %v1345 = vpack.c.b16 %v1049, %v1045
    %v1346 = vpack.c.b16 %v1050, %v1046
    %v1347 = vpack.c.b16 %v1051, %v1047
    %v1348 = vpack.c.b16 %v1056, %v1052
    %v1349 = vpack.c.b16 %v1057, %v1053
    %v1350 = vpack.c.b16 %v1058, %v1054
    %v1351 = vpack.c.b16 %v1059, %v1055
    %v1352 = vpack.c.b16 %v1064, %v1060
    %v1353 = vpack.c.b16 %v1065, %v1061
    %v1354 = vpack.c.b16 %v1066, %v1062
    %v1355 = vpack.c.b16 %v1067, %v1063
    %v1356 = vpack.c.b16 %v1072, %v1068
    %v1357 = vpack.c.b16 %v1073, %v1069
    %v1358 = vpack.c.b16 %v1074, %v1070
    %v1359 = vpack.c.b16 %v1075, %v1071
    %v1360 = vpack.c.b16 %v1080, %v1076
    %v1361 = vpack.c.b16 %v1081, %v1077
    %v1362 = vpack.c.b16 %v1082, %v1078
    %v1363 = vpack.c.b16 %v1083, %v1079
    %v1364 = vpack.c.b16 %v1088, %v1084
    %v1365 = vpack.c.b16 %v1089, %v1085
    %v1366 = vpack.c.b16 %v1090, %v1086
    %v1367 = vpack.c.b16 %v1091, %v1087
    %v1368 = vpack.c.b16 %v1096, %v1092
    %v1369 = vpack.c.b16 %v1097, %v1093
    %v1370 = vpack.c.b16 %v1098, %v1094
    %v1371 = vpack.c.b16 %v1099, %v1095
    %v1372 = vpack.c.b16 %v1104, %v1100
    %v1373 = vpack.c.b16 %v1105, %v1101
    %v1374 = vpack.c.b16 %v1106, %v1102
    %v1375 = vpack.c.b16 %v1107, %v1103
    %v1376 = vpack.c.b16 %v1112, %v1108
    %v1377 = vpack.c.b16 %v1113, %v1109
    %v1378 = vpack.c.b16 %v1114, %v1110
    %v1379 = vpack.c.b16 %v1115, %v1111
    %v1380 = vpack.c.b16 %v1120, %v1116
    %v1381 = vpack.c.b16 %v1121, %v1117
    %v1382 = vpack.c.b16 %v1122, %v1118
    %v1383 = vpack.c.b16 %v1123, %v1119
    %v1384 = vpack.c.b16 %v1128, %v1124
    %v1385 = vpack.c.b16 %v1129, %v1125
    %v1386 = vpack.c.b16 %v1130, %v1126
    %v1387 = vpack.c.b16 %v1131, %v1127
    %1644 = vmatpush.bf16.msra.mxu0 %v1160
    %1645 = vmatpush.bf16.msra.mxu0 %v1156
    %1646 = vmatpush.bf16.msra.mxu0 %v1152
    %1647 = vmatpush.bf16.msra.mxu0 %v1148
    %1648 = vmatpush.bf16.msra.mxu0 %v1144
    %1649 = vmatpush.bf16.msra.mxu0 %v1140
    %1650 = vmatpush.bf16.msra.mxu0 %v1136
    %1651 = vmatpush.bf16.msra.mxu0 %v1132
    %1652 = vmatmul.bf16.gmra.mxu0 %v90
    %v1653 = vpop.f32.mrf.mxu0
    %v1654 = vadd.f32 %v356, %v1653
    %v1655 = vpop.f32.mrf.mxu0
    %1656 = vdwg.mxu0
    %1657 = vmatpush.bf16.msra.mxu0 %v1192
    %1658 = vmatpush.bf16.msra.mxu0 %v1188
    %1659 = vmatpush.bf16.msra.mxu0 %v1184
    %1660 = vmatpush.bf16.msra.mxu0 %v1180
    %1661 = vmatpush.bf16.msra.mxu0 %v1176
    %1662 = vmatpush.bf16.msra.mxu0 %v1172
    %1663 = vmatpush.bf16.msra.mxu0 %v1168
    %1664 = vmatpush.bf16.msra.mxu0 %v1164
    %1665 = vmatmul.bf16.gmra.mxu0 %v91
    %v1666 = vpop.f32.mrf.mxu0
    %v1667 = vadd.f32 %v1654, %v1666
    %v1668 = vpop.f32.mrf.mxu0
    %1669 = vdwg.mxu0
    %1670 = vmatpush.bf16.msra.mxu0 %v1224
    %1671 = vmatpush.bf16.msra.mxu0 %v1220
    %1672 = vmatpush.bf16.msra.mxu0 %v1216
    %1673 = vmatpush.bf16.msra.mxu0 %v1212
    %1674 = vmatpush.bf16.msra.mxu0 %v1208
    %1675 = vmatpush.bf16.msra.mxu0 %v1204
    %1676 = vmatpush.bf16.msra.mxu0 %v1200
    %1677 = vmatpush.bf16.msra.mxu0 %v1196
    %1678 = vmatmul.bf16.gmra.mxu0 %v92
    %v1679 = vpop.f32.mrf.mxu0
    %v1680 = vadd.f32 %v1667, %v1679
    %v1681 = vpop.f32.mrf.mxu0
    %1682 = vdwg.mxu0
    %1683 = vmatpush.bf16.msra.mxu0 %v1256
    %1684 = vmatpush.bf16.msra.mxu0 %v1252
    %1685 = vmatpush.bf16.msra.mxu0 %v1248
    %1686 = vmatpush.bf16.msra.mxu0 %v1244
    %1687 = vmatpush.bf16.msra.mxu0 %v1240
    %1688 = vmatpush.bf16.msra.mxu0 %v1236
    %1689 = vmatpush.bf16.msra.mxu0 %v1232
    %1690 = vmatpush.bf16.msra.mxu0 %v1228
    %1691 = vmatmul.bf16.gmra.mxu0 %v93
    %v1692 = vpop.f32.mrf.mxu0
    %v1693 = vadd.f32 %v1680, %v1692
    %v1694 = vpop.f32.mrf.mxu0
    %1695 = vdwg.mxu0
    %1696 = vmatpush.bf16.msra.mxu0 %v1288
    %1697 = vmatpush.bf16.msra.mxu0 %v1284
    %1698 = vmatpush.bf16.msra.mxu0 %v1280
    %1699 = vmatpush.bf16.msra.mxu0 %v1276
    %1700 = vmatpush.bf16.msra.mxu0 %v1272
    %1701 = vmatpush.bf16.msra.mxu0 %v1268
    %1702 = vmatpush.bf16.msra.mxu0 %v1264
    %1703 = vmatpush.bf16.msra.mxu0 %v1260
    %1704 = vmatmul.bf16.gmra.mxu0 %v94
    %v1705 = vpop.f32.mrf.mxu0
    %v1706 = vadd.f32 %v1693, %v1705
    %v1707 = vpop.f32.mrf.mxu0
    %1708 = vdwg.mxu0
    %1709 = vmatpush.bf16.msra.mxu0 %v1320
    %1710 = vmatpush.bf16.msra.mxu0 %v1316
    %1711 = vmatpush.bf16.msra.mxu0 %v1312
    %1712 = vmatpush.bf16.msra.mxu0 %v1308
    %1713 = vmatpush.bf16.msra.mxu0 %v1304
    %1714 = vmatpush.bf16.msra.mxu0 %v1300
    %1715 = vmatpush.bf16.msra.mxu0 %v1296
    %1716 = vmatpush.bf16.msra.mxu0 %v1292
    %1717 = vmatmul.bf16.gmra.mxu0 %v95
    %v1718 = vpop.f32.mrf.mxu0
    %v1719 = vadd.f32 %v1706, %v1718
    %v1720 = vpop.f32.mrf.mxu0
    %1721 = vdwg.mxu0
    %1722 = vmatpush.bf16.msra.mxu0 %v1352
    %1723 = vmatpush.bf16.msra.mxu0 %v1348
    %1724 = vmatpush.bf16.msra.mxu0 %v1344
    %1725 = vmatpush.bf16.msra.mxu0 %v1340
    %1726 = vmatpush.bf16.msra.mxu0 %v1336
    %1727 = vmatpush.bf16.msra.mxu0 %v1332
    %1728 = vmatpush.bf16.msra.mxu0 %v1328
    %1729 = vmatpush.bf16.msra.mxu0 %v1324
    %1730 = vmatmul.bf16.gmra.mxu0 %v96
    %v1731 = vpop.f32.mrf.mxu0
    %v1732 = vadd.f32 %v1719, %v1731
    %v1733 = vpop.f32.mrf.mxu0
    %1734 = vdwg.mxu0
    %1735 = vmatpush.bf16.msra.mxu0 %v1384
    %1736 = vmatpush.bf16.msra.mxu0 %v1380
    %1737 = vmatpush.bf16.msra.mxu0 %v1376
    %1738 = vmatpush.bf16.msra.mxu0 %v1372
    %1739 = vmatpush.bf16.msra.mxu0 %v1368
    %1740 = vmatpush.bf16.msra.mxu0 %v1364
    %1741 = vmatpush.bf16.msra.mxu0 %v1360
    %1742 = vmatpush.bf16.msra.mxu0 %v1356
    %1743 = vmatmul.bf16.gmra.mxu0 %v97
    %v1744 = vpop.f32.mrf.mxu0
    %v1745 = vadd.f32 %v1732, %v1744
    %v1746 = vpop.f32.mrf.mxu0
    %1747 = vdwg.mxu0
    %1748 = vmatpush.bf16.msra.mxu0 %v1161
    %1749 = vmatpush.bf16.msra.mxu0 %v1157
    %1750 = vmatpush.bf16.msra.mxu0 %v1153
    %1751 = vmatpush.bf16.msra.mxu0 %v1149
    %1752 = vmatpush.bf16.msra.mxu0 %v1145
    %1753 = vmatpush.bf16.msra.mxu0 %v1141
    %1754 = vmatpush.bf16.msra.mxu0 %v1137
    %1755 = vmatpush.bf16.msra.mxu0 %v1133
    %1756 = vmatmul.bf16.gmra.mxu0 %v90
    %v1757 = vpop.f32.mrf.mxu0
    %v1758 = vadd.f32 %v357, %v1757
    %v1759 = vpop.f32.mrf.mxu0
    %1760 = vdwg.mxu0
    %1761 = vmatpush.bf16.msra.mxu0 %v1193
    %1762 = vmatpush.bf16.msra.mxu0 %v1189
    %1763 = vmatpush.bf16.msra.mxu0 %v1185
    %1764 = vmatpush.bf16.msra.mxu0 %v1181
    %1765 = vmatpush.bf16.msra.mxu0 %v1177
    %1766 = vmatpush.bf16.msra.mxu0 %v1173
    %1767 = vmatpush.bf16.msra.mxu0 %v1169
    %1768 = vmatpush.bf16.msra.mxu0 %v1165
    %1769 = vmatmul.bf16.gmra.mxu0 %v91
    %v1770 = vpop.f32.mrf.mxu0
    %v1771 = vadd.f32 %v1758, %v1770
    %v1772 = vpop.f32.mrf.mxu0
    %1773 = vdwg.mxu0
    %1774 = vmatpush.bf16.msra.mxu0 %v1225
    %1775 = vmatpush.bf16.msra.mxu0 %v1221
    %1776 = vmatpush.bf16.msra.mxu0 %v1217
    %1777 = vmatpush.bf16.msra.mxu0 %v1213
    %1778 = vmatpush.bf16.msra.mxu0 %v1209
    %1779 = vmatpush.bf16.msra.mxu0 %v1205
    %1780 = vmatpush.bf16.msra.mxu0 %v1201
    %1781 = vmatpush.bf16.msra.mxu0 %v1197
    %1782 = vmatmul.bf16.gmra.mxu0 %v92
    %v1783 = vpop.f32.mrf.mxu0
    %v1784 = vadd.f32 %v1771, %v1783
    %v1785 = vpop.f32.mrf.mxu0
    %1786 = vdwg.mxu0
    %1787 = vmatpush.bf16.msra.mxu0 %v1257
    %1788 = vmatpush.bf16.msra.mxu0 %v1253
    %1789 = vmatpush.bf16.msra.mxu0 %v1249
    %1790 = vmatpush.bf16.msra.mxu0 %v1245
    %1791 = vmatpush.bf16.msra.mxu0 %v1241
    %1792 = vmatpush.bf16.msra.mxu0 %v1237
    %1793 = vmatpush.bf16.msra.mxu0 %v1233
    %1794 = vmatpush.bf16.msra.mxu0 %v1229
    %1795 = vmatmul.bf16.gmra.mxu0 %v93
    %v1796 = vpop.f32.mrf.mxu0
    %v1797 = vadd.f32 %v1784, %v1796
    %v1798 = vpop.f32.mrf.mxu0
    %1799 = vdwg.mxu0
    %1800 = vmatpush.bf16.msra.mxu0 %v1289
    %1801 = vmatpush.bf16.msra.mxu0 %v1285
    %1802 = vmatpush.bf16.msra.mxu0 %v1281
    %1803 = vmatpush.bf16.msra.mxu0 %v1277
    %1804 = vmatpush.bf16.msra.mxu0 %v1273
    %1805 = vmatpush.bf16.msra.mxu0 %v1269
    %1806 = vmatpush.bf16.msra.mxu0 %v1265
    %1807 = vmatpush.bf16.msra.mxu0 %v1261
    %1808 = vmatmul.bf16.gmra.mxu0 %v94
    %v1809 = vpop.f32.mrf.mxu0
    %v1810 = vadd.f32 %v1797, %v1809
    %v1811 = vpop.f32.mrf.mxu0
    %1812 = vdwg.mxu0
    %1813 = vmatpush.bf16.msra.mxu0 %v1321
    %1814 = vmatpush.bf16.msra.mxu0 %v1317
    %1815 = vmatpush.bf16.msra.mxu0 %v1313
    %1816 = vmatpush.bf16.msra.mxu0 %v1309
    %1817 = vmatpush.bf16.msra.mxu0 %v1305
    %1818 = vmatpush.bf16.msra.mxu0 %v1301
    %1819 = vmatpush.bf16.msra.mxu0 %v1297
    %1820 = vmatpush.bf16.msra.mxu0 %v1293
    %1821 = vmatmul.bf16.gmra.mxu0 %v95
    %v1822 = vpop.f32.mrf.mxu0
    %v1823 = vadd.f32 %v1810, %v1822
    %v1824 = vpop.f32.mrf.mxu0
    %1825 = vdwg.mxu0
    %1826 = vmatpush.bf16.msra.mxu0 %v1353
    %1827 = vmatpush.bf16.msra.mxu0 %v1349
    %1828 = vmatpush.bf16.msra.mxu0 %v1345
    %1829 = vmatpush.bf16.msra.mxu0 %v1341
    %1830 = vmatpush.bf16.msra.mxu0 %v1337
    %1831 = vmatpush.bf16.msra.mxu0 %v1333
    %1832 = vmatpush.bf16.msra.mxu0 %v1329
    %1833 = vmatpush.bf16.msra.mxu0 %v1325
    %1834 = vmatmul.bf16.gmra.mxu0 %v96
    %v1835 = vpop.f32.mrf.mxu0
    %v1836 = vadd.f32 %v1823, %v1835
    %v1837 = vpop.f32.mrf.mxu0
    %1838 = vdwg.mxu0
    %1839 = vmatpush.bf16.msra.mxu0 %v1385
    %1840 = vmatpush.bf16.msra.mxu0 %v1381
    %1841 = vmatpush.bf16.msra.mxu0 %v1377
    %1842 = vmatpush.bf16.msra.mxu0 %v1373
    %1843 = vmatpush.bf16.msra.mxu0 %v1369
    %1844 = vmatpush.bf16.msra.mxu0 %v1365
    %1845 = vmatpush.bf16.msra.mxu0 %v1361
    %1846 = vmatpush.bf16.msra.mxu0 %v1357
    %1847 = vmatmul.bf16.gmra.mxu0 %v97
    %v1848 = vpop.f32.mrf.mxu0
    %v1849 = vadd.f32 %v1836, %v1848
    %v1850 = vpop.f32.mrf.mxu0
    %1851 = vdwg.mxu0
    %1852 = vmatpush.bf16.msra.mxu0 %v1162
    %1853 = vmatpush.bf16.msra.mxu0 %v1158
    %1854 = vmatpush.bf16.msra.mxu0 %v1154
    %1855 = vmatpush.bf16.msra.mxu0 %v1150
    %1856 = vmatpush.bf16.msra.mxu0 %v1146
    %1857 = vmatpush.bf16.msra.mxu0 %v1142
    %1858 = vmatpush.bf16.msra.mxu0 %v1138
    %1859 = vmatpush.bf16.msra.mxu0 %v1134
    %1860 = vmatmul.bf16.gmra.mxu0 %v90
    %v1861 = vpop.f32.mrf.mxu0
    %v1862 = vadd.f32 %v358, %v1861
    %v1863 = vpop.f32.mrf.mxu0
    %1864 = vdwg.mxu0
    %1865 = vmatpush.bf16.msra.mxu0 %v1194
    %1866 = vmatpush.bf16.msra.mxu0 %v1190
    %1867 = vmatpush.bf16.msra.mxu0 %v1186
    %1868 = vmatpush.bf16.msra.mxu0 %v1182
    %1869 = vmatpush.bf16.msra.mxu0 %v1178
    %1870 = vmatpush.bf16.msra.mxu0 %v1174
    %1871 = vmatpush.bf16.msra.mxu0 %v1170
    %1872 = vmatpush.bf16.msra.mxu0 %v1166
    %1873 = vmatmul.bf16.gmra.mxu0 %v91
    %v1874 = vpop.f32.mrf.mxu0
    %v1875 = vadd.f32 %v1862, %v1874
    %v1876 = vpop.f32.mrf.mxu0
    %1877 = vdwg.mxu0
    %1878 = vmatpush.bf16.msra.mxu0 %v1226
    %1879 = vmatpush.bf16.msra.mxu0 %v1222
    %1880 = vmatpush.bf16.msra.mxu0 %v1218
    %1881 = vmatpush.bf16.msra.mxu0 %v1214
    %1882 = vmatpush.bf16.msra.mxu0 %v1210
    %1883 = vmatpush.bf16.msra.mxu0 %v1206
    %1884 = vmatpush.bf16.msra.mxu0 %v1202
    %1885 = vmatpush.bf16.msra.mxu0 %v1198
    %1886 = vmatmul.bf16.gmra.mxu0 %v92
    %v1887 = vpop.f32.mrf.mxu0
    %v1888 = vadd.f32 %v1875, %v1887
    %v1889 = vpop.f32.mrf.mxu0
    %1890 = vdwg.mxu0
    %1891 = vmatpush.bf16.msra.mxu0 %v1258
    %1892 = vmatpush.bf16.msra.mxu0 %v1254
    %1893 = vmatpush.bf16.msra.mxu0 %v1250
    %1894 = vmatpush.bf16.msra.mxu0 %v1246
    %1895 = vmatpush.bf16.msra.mxu0 %v1242
    %1896 = vmatpush.bf16.msra.mxu0 %v1238
    %1897 = vmatpush.bf16.msra.mxu0 %v1234
    %1898 = vmatpush.bf16.msra.mxu0 %v1230
    %1899 = vmatmul.bf16.gmra.mxu0 %v93
    %v1900 = vpop.f32.mrf.mxu0
    %v1901 = vadd.f32 %v1888, %v1900
    %v1902 = vpop.f32.mrf.mxu0
    %1903 = vdwg.mxu0
    %1904 = vmatpush.bf16.msra.mxu0 %v1290
    %1905 = vmatpush.bf16.msra.mxu0 %v1286
    %1906 = vmatpush.bf16.msra.mxu0 %v1282
    %1907 = vmatpush.bf16.msra.mxu0 %v1278
    %1908 = vmatpush.bf16.msra.mxu0 %v1274
    %1909 = vmatpush.bf16.msra.mxu0 %v1270
    %1910 = vmatpush.bf16.msra.mxu0 %v1266
    %1911 = vmatpush.bf16.msra.mxu0 %v1262
    %1912 = vmatmul.bf16.gmra.mxu0 %v94
    %v1913 = vpop.f32.mrf.mxu0
    %v1914 = vadd.f32 %v1901, %v1913
    %v1915 = vpop.f32.mrf.mxu0
    %1916 = vdwg.mxu0
    %1917 = vmatpush.bf16.msra.mxu0 %v1322
    %1918 = vmatpush.bf16.msra.mxu0 %v1318
    %1919 = vmatpush.bf16.msra.mxu0 %v1314
    %1920 = vmatpush.bf16.msra.mxu0 %v1310
    %1921 = vmatpush.bf16.msra.mxu0 %v1306
    %1922 = vmatpush.bf16.msra.mxu0 %v1302
    %1923 = vmatpush.bf16.msra.mxu0 %v1298
    %1924 = vmatpush.bf16.msra.mxu0 %v1294
    %1925 = vmatmul.bf16.gmra.mxu0 %v95
    %v1926 = vpop.f32.mrf.mxu0
    %v1927 = vadd.f32 %v1914, %v1926
    %v1928 = vpop.f32.mrf.mxu0
    %1929 = vdwg.mxu0
    %1930 = vmatpush.bf16.msra.mxu0 %v1354
    %1931 = vmatpush.bf16.msra.mxu0 %v1350
    %1932 = vmatpush.bf16.msra.mxu0 %v1346
    %1933 = vmatpush.bf16.msra.mxu0 %v1342
    %1934 = vmatpush.bf16.msra.mxu0 %v1338
    %1935 = vmatpush.bf16.msra.mxu0 %v1334
    %1936 = vmatpush.bf16.msra.mxu0 %v1330
    %1937 = vmatpush.bf16.msra.mxu0 %v1326
    %1938 = vmatmul.bf16.gmra.mxu0 %v96
    %v1939 = vpop.f32.mrf.mxu0
    %v1940 = vadd.f32 %v1927, %v1939
    %v1941 = vpop.f32.mrf.mxu0
    %1942 = vdwg.mxu0
    %1943 = vmatpush.bf16.msra.mxu0 %v1386
    %1944 = vmatpush.bf16.msra.mxu0 %v1382
    %1945 = vmatpush.bf16.msra.mxu0 %v1378
    %1946 = vmatpush.bf16.msra.mxu0 %v1374
    %1947 = vmatpush.bf16.msra.mxu0 %v1370
    %1948 = vmatpush.bf16.msra.mxu0 %v1366
    %1949 = vmatpush.bf16.msra.mxu0 %v1362
    %1950 = vmatpush.bf16.msra.mxu0 %v1358
    %1951 = vmatmul.bf16.gmra.mxu0 %v97
    %v1952 = vpop.f32.mrf.mxu0
    %v1953 = vadd.f32 %v1940, %v1952
    %v1954 = vpop.f32.mrf.mxu0
    %1955 = vdwg.mxu0
    %1956 = vmatpush.bf16.msra.mxu0 %v1163
    %1957 = vmatpush.bf16.msra.mxu0 %v1159
    %1958 = vmatpush.bf16.msra.mxu0 %v1155
    %1959 = vmatpush.bf16.msra.mxu0 %v1151
    %1960 = vmatpush.bf16.msra.mxu0 %v1147
    %1961 = vmatpush.bf16.msra.mxu0 %v1143
    %1962 = vmatpush.bf16.msra.mxu0 %v1139
    %1963 = vmatpush.bf16.msra.mxu0 %v1135
    %1964 = vmatmul.bf16.gmra.mxu0 %v90
    %v1965 = vpop.f32.mrf.mxu0
    %v1966 = vadd.f32 %v359, %v1965
    %v1967 = vpop.f32.mrf.mxu0
    %1968 = vdwg.mxu0
    %1969 = vmatpush.bf16.msra.mxu0 %v1195
    %1970 = vmatpush.bf16.msra.mxu0 %v1191
    %1971 = vmatpush.bf16.msra.mxu0 %v1187
    %1972 = vmatpush.bf16.msra.mxu0 %v1183
    %1973 = vmatpush.bf16.msra.mxu0 %v1179
    %1974 = vmatpush.bf16.msra.mxu0 %v1175
    %1975 = vmatpush.bf16.msra.mxu0 %v1171
    %1976 = vmatpush.bf16.msra.mxu0 %v1167
    %1977 = vmatmul.bf16.gmra.mxu0 %v91
    %v1978 = vpop.f32.mrf.mxu0
    %v1979 = vadd.f32 %v1966, %v1978
    %v1980 = vpop.f32.mrf.mxu0
    %1981 = vdwg.mxu0
    %1982 = vmatpush.bf16.msra.mxu0 %v1227
    %1983 = vmatpush.bf16.msra.mxu0 %v1223
    %1984 = vmatpush.bf16.msra.mxu0 %v1219
    %1985 = vmatpush.bf16.msra.mxu0 %v1215
    %1986 = vmatpush.bf16.msra.mxu0 %v1211
    %1987 = vmatpush.bf16.msra.mxu0 %v1207
    %1988 = vmatpush.bf16.msra.mxu0 %v1203
    %1989 = vmatpush.bf16.msra.mxu0 %v1199
    %1990 = vmatmul.bf16.gmra.mxu0 %v92
    %v1991 = vpop.f32.mrf.mxu0
    %v1992 = vadd.f32 %v1979, %v1991
    %v1993 = vpop.f32.mrf.mxu0
    %1994 = vdwg.mxu0
    %1995 = vmatpush.bf16.msra.mxu0 %v1259
    %1996 = vmatpush.bf16.msra.mxu0 %v1255
    %1997 = vmatpush.bf16.msra.mxu0 %v1251
    %1998 = vmatpush.bf16.msra.mxu0 %v1247
    %1999 = vmatpush.bf16.msra.mxu0 %v1243
    %2000 = vmatpush.bf16.msra.mxu0 %v1239
    %2001 = vmatpush.bf16.msra.mxu0 %v1235
    %2002 = vmatpush.bf16.msra.mxu0 %v1231
    %2003 = vmatmul.bf16.gmra.mxu0 %v93
    %v2004 = vpop.f32.mrf.mxu0
    %v2005 = vadd.f32 %v1992, %v2004
    %v2006 = vpop.f32.mrf.mxu0
    %2007 = vdwg.mxu0
    %2008 = vmatpush.bf16.msra.mxu0 %v1291
    %2009 = vmatpush.bf16.msra.mxu0 %v1287
    %2010 = vmatpush.bf16.msra.mxu0 %v1283
    %2011 = vmatpush.bf16.msra.mxu0 %v1279
    %2012 = vmatpush.bf16.msra.mxu0 %v1275
    %2013 = vmatpush.bf16.msra.mxu0 %v1271
    %2014 = vmatpush.bf16.msra.mxu0 %v1267
    %2015 = vmatpush.bf16.msra.mxu0 %v1263
    %2016 = vmatmul.bf16.gmra.mxu0 %v94
    %v2017 = vpop.f32.mrf.mxu0
    %v2018 = vadd.f32 %v2005, %v2017
    %v2019 = vpop.f32.mrf.mxu0
    %2020 = vdwg.mxu0
    %2021 = vmatpush.bf16.msra.mxu0 %v1323
    %2022 = vmatpush.bf16.msra.mxu0 %v1319
    %2023 = vmatpush.bf16.msra.mxu0 %v1315
    %2024 = vmatpush.bf16.msra.mxu0 %v1311
    %2025 = vmatpush.bf16.msra.mxu0 %v1307
    %2026 = vmatpush.bf16.msra.mxu0 %v1303
    %2027 = vmatpush.bf16.msra.mxu0 %v1299
    %2028 = vmatpush.bf16.msra.mxu0 %v1295
    %2029 = vmatmul.bf16.gmra.mxu0 %v95
    %v2030 = vpop.f32.mrf.mxu0
    %v2031 = vadd.f32 %v2018, %v2030
    %v2032 = vpop.f32.mrf.mxu0
    %2033 = vdwg.mxu0
    %2034 = vmatpush.bf16.msra.mxu0 %v1355
    %2035 = vmatpush.bf16.msra.mxu0 %v1351
    %2036 = vmatpush.bf16.msra.mxu0 %v1347
    %2037 = vmatpush.bf16.msra.mxu0 %v1343
    %2038 = vmatpush.bf16.msra.mxu0 %v1339
    %2039 = vmatpush.bf16.msra.mxu0 %v1335
    %2040 = vmatpush.bf16.msra.mxu0 %v1331
    %2041 = vmatpush.bf16.msra.mxu0 %v1327
    %2042 = vmatmul.bf16.gmra.mxu0 %v96
    %v2043 = vpop.f32.mrf.mxu0
    %v2044 = vadd.f32 %v2031, %v2043
    %v2045 = vpop.f32.mrf.mxu0
    %2046 = vdwg.mxu0
    %2047 = vmatpush.bf16.msra.mxu0 %v1387
    %2048 = vmatpush.bf16.msra.mxu0 %v1383
    %2049 = vmatpush.bf16.msra.mxu0 %v1379
    %2050 = vmatpush.bf16.msra.mxu0 %v1375
    %2051 = vmatpush.bf16.msra.mxu0 %v1371
    %2052 = vmatpush.bf16.msra.mxu0 %v1367
    %2053 = vmatpush.bf16.msra.mxu0 %v1363
    %2054 = vmatpush.bf16.msra.mxu0 %v1359
    %2055 = vmatmul.bf16.gmra.mxu0 %v97
    %v2056 = vpop.f32.mrf.mxu0
    %v2057 = vadd.f32 %v2044, %v2056
    %v2058 = vpop.f32.mrf.mxu0
    %2059 = vdwg.mxu0
    %v2060 = vmax.f32 %v1745, 0.0
    %v2061 = vmax.f32 %v1849, 0.0
    %v2062 = vmax.f32 %v1953, 0.0
    %v2063 = vmax.f32 %v2057, 0.0
    %v2064 = vpack.c.bf16 %v2060, %v2060
    %v2065 = vpack.c.bf16 %v2061, %v2061
    %v2066 = vpack.c.bf16 %v2062, %v2062
    %v2067 = vpack.c.bf16 %v2063, %v2063
    %v2068 = vld [vmem:[#allocation5] sm:$0xf]
    %v2069 = vld [vmem:[#allocation5 + $0x4] sm:$0xf]
    %v2070 = vld [vmem:[#allocation5 + $0x8] sm:$0xf]
    %v2071 = vld [vmem:[#allocation5 + $0xc] sm:$0xf]
    %v2072 = vld [vmem:[#allocation5 + $0x10] sm:$0xf]
    %v2073 = vld [vmem:[#allocation5 + $0x14] sm:$0xf]
    %v2074 = vld [vmem:[#allocation5 + $0x18] sm:$0xf]
    %v2075 = vld [vmem:[#allocation5 + $0x1c] sm:$0xf]
    %v2076 = vld [vmem:[#allocation5 + $0x20] sm:$0xf]
    %v2077 = vld [vmem:[#allocation5 + $0x24] sm:$0xf]
    %v2078 = vld [vmem:[#allocation5 + $0x28] sm:$0xf]
    %v2079 = vld [vmem:[#allocation5 + $0x2c] sm:$0xf]
    %v2080 = vld [vmem:[#allocation5 + $0x30] sm:$0xf]
    %v2081 = vld [vmem:[#allocation5 + $0x34] sm:$0xf]
    %v2082 = vld [vmem:[#allocation5 + $0x38] sm:$0xf]
    %v2083 = vld [vmem:[#allocation5 + $0x3c] sm:$0xf]
    %v2084 = vld [vmem:[#allocation5 + $0x40] sm:$0xf]
    %v2085 = vld [vmem:[#allocation5 + $0x44] sm:$0xf]
    %v2086 = vld [vmem:[#allocation5 + $0x48] sm:$0xf]
    %v2087 = vld [vmem:[#allocation5 + $0x4c] sm:$0xf]
    %v2088 = vld [vmem:[#allocation5 + $0x50] sm:$0xf]
    %v2089 = vld [vmem:[#allocation5 + $0x54] sm:$0xf]
    %v2090 = vld [vmem:[#allocation5 + $0x58] sm:$0xf]
    %v2091 = vld [vmem:[#allocation5 + $0x5c] sm:$0xf]
    %v2092 = vld [vmem:[#allocation5 + $0x60] sm:$0xf]
    %v2093 = vld [vmem:[#allocation5 + $0x64] sm:$0xf]
    %v2094 = vld [vmem:[#allocation5 + $0x68] sm:$0xf]
    %v2095 = vld [vmem:[#allocation5 + $0x6c] sm:$0xf]
    %v2096 = vld [vmem:[#allocation5 + $0x70] sm:$0xf]
    %v2097 = vld [vmem:[#allocation5 + $0x74] sm:$0xf]
    %v2098 = vld [vmem:[#allocation5 + $0x78] sm:$0xf]
    %v2099 = vld [vmem:[#allocation5 + $0x7c] sm:$0xf]
    %v2100 = vld [vmem:[#allocation5 + $0x80] sm:$0xf]
    %v2101 = vld [vmem:[#allocation5 + $0x84] sm:$0xf]
    %v2102 = vld [vmem:[#allocation5 + $0x88] sm:$0xf]
    %v2103 = vld [vmem:[#allocation5 + $0x8c] sm:$0xf]
    %v2104 = vld [vmem:[#allocation5 + $0x90] sm:$0xf]
    %v2105 = vld [vmem:[#allocation5 + $0x94] sm:$0xf]
    %v2106 = vld [vmem:[#allocation5 + $0x98] sm:$0xf]
    %v2107 = vld [vmem:[#allocation5 + $0x9c] sm:$0xf]
    %v2108 = vld [vmem:[#allocation5 + $0xa0] sm:$0xf]
    %v2109 = vld [vmem:[#allocation5 + $0xa4] sm:$0xf]
    %v2110 = vld [vmem:[#allocation5 + $0xa8] sm:$0xf]
    %v2111 = vld [vmem:[#allocation5 + $0xac] sm:$0xf]
    %v2112 = vld [vmem:[#allocation5 + $0xb0] sm:$0xf]
    %v2113 = vld [vmem:[#allocation5 + $0xb4] sm:$0xf]
    %v2114 = vld [vmem:[#allocation5 + $0xb8] sm:$0xf]
    %v2115 = vld [vmem:[#allocation5 + $0xbc] sm:$0xf]
    %v2116 = vld [vmem:[#allocation5 + $0xc0] sm:$0xf]
    %v2117 = vld [vmem:[#allocation5 + $0xc4] sm:$0xf]
    %v2118 = vld [vmem:[#allocation5 + $0xc8] sm:$0xf]
    %v2119 = vld [vmem:[#allocation5 + $0xcc] sm:$0xf]
    %v2120 = vld [vmem:[#allocation5 + $0xd0] sm:$0xf]
    %v2121 = vld [vmem:[#allocation5 + $0xd4] sm:$0xf]
    %v2122 = vld [vmem:[#allocation5 + $0xd8] sm:$0xf]
    %v2123 = vld [vmem:[#allocation5 + $0xdc] sm:$0xf]
    %v2124 = vld [vmem:[#allocation5 + $0xe0] sm:$0xf]
    %v2125 = vld [vmem:[#allocation5 + $0xe4] sm:$0xf]
    %v2126 = vld [vmem:[#allocation5 + $0xe8] sm:$0xf]
    %v2127 = vld [vmem:[#allocation5 + $0xec] sm:$0xf]
    %v2128 = vld [vmem:[#allocation5 + $0xf0] sm:$0xf]
    %v2129 = vld [vmem:[#allocation5 + $0xf4] sm:$0xf]
    %v2130 = vld [vmem:[#allocation5 + $0xf8] sm:$0xf]
    %v2131 = vld [vmem:[#allocation5 + $0xfc] sm:$0xf]
    %v2132 = vld [vmem:[%s5] sm:$0x1]
    %v2134 = vperm.slane %v2132, 0
    %v2200 = vunpack.c.l.b16 %v2068
    %v2201 = vunpack.c.l.b16 %v2069
    %v2202 = vunpack.c.l.b16 %v2070
    %v2203 = vunpack.c.l.b16 %v2071
    %v2204 = vunpack.c.l.b16 %v2072
    %v2205 = vunpack.c.l.b16 %v2073
    %v2206 = vunpack.c.l.b16 %v2074
    %v2207 = vunpack.c.l.b16 %v2075
    %v2208 = vunpack.c.l.b16 %v2076
    %v2209 = vunpack.c.l.b16 %v2077
    %v2210 = vunpack.c.l.b16 %v2078
    %v2211 = vunpack.c.l.b16 %v2079
    %v2212 = vunpack.c.l.b16 %v2080
    %v2213 = vunpack.c.l.b16 %v2081
    %v2214 = vunpack.c.l.b16 %v2082
    %v2215 = vunpack.c.l.b16 %v2083
    %v2216 = vunpack.c.l.b16 %v2084
    %v2217 = vunpack.c.l.b16 %v2085
    %v2218 = vunpack.c.l.b16 %v2086
    %v2219 = vunpack.c.l.b16 %v2087
    %v2220 = vunpack.c.l.b16 %v2088
    %v2221 = vunpack.c.l.b16 %v2089
    %v2222 = vunpack.c.l.b16 %v2090
    %v2223 = vunpack.c.l.b16 %v2091
    %v2224 = vunpack.c.l.b16 %v2092
    %v2225 = vunpack.c.l.b16 %v2093
    %v2226 = vunpack.c.l.b16 %v2094
    %v2227 = vunpack.c.l.b16 %v2095
    %v2228 = vunpack.c.l.b16 %v2096
    %v2229 = vunpack.c.l.b16 %v2097
    %v2230 = vunpack.c.l.b16 %v2098
    %v2231 = vunpack.c.l.b16 %v2099
    %v2232 = vunpack.c.l.b16 %v2100
    %v2233 = vunpack.c.l.b16 %v2101
    %v2234 = vunpack.c.l.b16 %v2102
    %v2235 = vunpack.c.l.b16 %v2103
    %v2236 = vunpack.c.l.b16 %v2104
    %v2237 = vunpack.c.l.b16 %v2105
    %v2238 = vunpack.c.l.b16 %v2106
    %v2239 = vunpack.c.l.b16 %v2107
    %v2240 = vunpack.c.l.b16 %v2108
    %v2241 = vunpack.c.l.b16 %v2109
    %v2242 = vunpack.c.l.b16 %v2110
    %v2243 = vunpack.c.l.b16 %v2111
    %v2244 = vunpack.c.l.b16 %v2112
    %v2245 = vunpack.c.l.b16 %v2113
    %v2246 = vunpack.c.l.b16 %v2114
    %v2247 = vunpack.c.l.b16 %v2115
    %v2248 = vunpack.c.l.b16 %v2116
    %v2249 = vunpack.c.l.b16 %v2117
    %v2250 = vunpack.c.l.b16 %v2118
    %v2251 = vunpack.c.l.b16 %v2119
    %v2252 = vunpack.c.l.b16 %v2120
    %v2253 = vunpack.c.l.b16 %v2121
    %v2254 = vunpack.c.l.b16 %v2122
    %v2255 = vunpack.c.l.b16 %v2123
    %v2256 = vunpack.c.l.b16 %v2124
    %v2257 = vunpack.c.l.b16 %v2125
    %v2258 = vunpack.c.l.b16 %v2126
    %v2259 = vunpack.c.l.b16 %v2127
    %v2260 = vunpack.c.l.b16 %v2128
    %v2261 = vunpack.c.l.b16 %v2129
    %v2262 = vunpack.c.l.b16 %v2130
    %v2263 = vunpack.c.l.b16 %v2131
    %v2264 = vpack.c.b16 %v2201, %v2200
    %v2265 = vpack.c.b16 %v2203, %v2202
    %v2266 = vpack.c.b16 %v2205, %v2204
    %v2267 = vpack.c.b16 %v2207, %v2206
    %v2268 = vpack.c.b16 %v2209, %v2208
    %v2269 = vpack.c.b16 %v2211, %v2210
    %v2270 = vpack.c.b16 %v2213, %v2212
    %v2271 = vpack.c.b16 %v2215, %v2214
    %v2272 = vpack.c.b16 %v2217, %v2216
    %v2273 = vpack.c.b16 %v2219, %v2218
    %v2274 = vpack.c.b16 %v2221, %v2220
    %v2275 = vpack.c.b16 %v2223, %v2222
    %v2276 = vpack.c.b16 %v2225, %v2224
    %v2277 = vpack.c.b16 %v2227, %v2226
    %v2278 = vpack.c.b16 %v2229, %v2228
    %v2279 = vpack.c.b16 %v2231, %v2230
    %v2280 = vpack.c.b16 %v2233, %v2232
    %v2281 = vpack.c.b16 %v2235, %v2234
    %v2282 = vpack.c.b16 %v2237, %v2236
    %v2283 = vpack.c.b16 %v2239, %v2238
    %v2284 = vpack.c.b16 %v2241, %v2240
    %v2285 = vpack.c.b16 %v2243, %v2242
    %v2286 = vpack.c.b16 %v2245, %v2244
    %v2287 = vpack.c.b16 %v2247, %v2246
    %v2288 = vpack.c.b16 %v2249, %v2248
    %v2289 = vpack.c.b16 %v2251, %v2250
    %v2290 = vpack.c.b16 %v2253, %v2252
    %v2291 = vpack.c.b16 %v2255, %v2254
    %v2292 = vpack.c.b16 %v2257, %v2256
    %v2293 = vpack.c.b16 %v2259, %v2258
    %v2294 = vpack.c.b16 %v2261, %v2260
    %v2295 = vpack.c.b16 %v2263, %v2262
    %2328 = vmatpush.bf16.msra.mxu0 %v2271
    %2329 = vmatpush.bf16.msra.mxu0 %v2270
    %2330 = vmatpush.bf16.msra.mxu0 %v2269
    %2331 = vmatpush.bf16.msra.mxu0 %v2268
    %2332 = vmatpush.bf16.msra.mxu0 %v2267
    %2333 = vmatpush.bf16.msra.mxu0 %v2266
    %2334 = vmatpush.bf16.msra.mxu0 %v2265
    %2335 = vmatpush.bf16.msra.mxu0 %v2264
    %2336 = vmatmul.bf16.gmra.mxu0 %v2064
    %v2337 = vpop.f32.mrf.mxu0
    %v2338 = vadd.f32 %v2134, %v2337
    %v2339 = vpop.f32.mrf.mxu0
    %2340 = vdwg.mxu0
    %2341 = vmatpush.bf16.msra.mxu0 %v2279
    %2342 = vmatpush.bf16.msra.mxu0 %v2278
    %2343 = vmatpush.bf16.msra.mxu0 %v2277
    %2344 = vmatpush.bf16.msra.mxu0 %v2276
    %2345 = vmatpush.bf16.msra.mxu0 %v2275
    %2346 = vmatpush.bf16.msra.mxu0 %v2274
    %2347 = vmatpush.bf16.msra.mxu0 %v2273
    %2348 = vmatpush.bf16.msra.mxu0 %v2272
    %2349 = vmatmul.bf16.gmra.mxu0 %v2065
    %v2350 = vpop.f32.mrf.mxu0
    %v2351 = vadd.f32 %v2338, %v2350
    %v2352 = vpop.f32.mrf.mxu0
    %2353 = vdwg.mxu0
    %2354 = vmatpush.bf16.msra.mxu0 %v2287
    %2355 = vmatpush.bf16.msra.mxu0 %v2286
    %2356 = vmatpush.bf16.msra.mxu0 %v2285
    %2357 = vmatpush.bf16.msra.mxu0 %v2284
    %2358 = vmatpush.bf16.msra.mxu0 %v2283
    %2359 = vmatpush.bf16.msra.mxu0 %v2282
    %2360 = vmatpush.bf16.msra.mxu0 %v2281
    %2361 = vmatpush.bf16.msra.mxu0 %v2280
    %2362 = vmatmul.bf16.gmra.mxu0 %v2066
    %v2363 = vpop.f32.mrf.mxu0
    %v2364 = vadd.f32 %v2351, %v2363
    %v2365 = vpop.f32.mrf.mxu0
    %2366 = vdwg.mxu0
    %2367 = vmatpush.bf16.msra.mxu0 %v2295
    %2368 = vmatpush.bf16.msra.mxu0 %v2294
    %2369 = vmatpush.bf16.msra.mxu0 %v2293
    %2370 = vmatpush.bf16.msra.mxu0 %v2292
    %2371 = vmatpush.bf16.msra.mxu0 %v2291
    %2372 = vmatpush.bf16.msra.mxu0 %v2290
    %2373 = vmatpush.bf16.msra.mxu0 %v2289
    %2374 = vmatpush.bf16.msra.mxu0 %v2288
    %2375 = vmatmul.bf16.gmra.mxu0 %v2067
    %v2376 = vpop.f32.mrf.mxu0
    %v2377 = vadd.f32 %v2364, %v2376
    %v2378 = vpop.f32.mrf.mxu0
    %2379 = vdwg.mxu0
    %v2380 = vmul.f32 %v2377, 0.5
    %v2381 = vmul.f32 %v2380, 1.442695
    %v2382 = vpow.pop %v2381
    %v2383 = vld [vmem:[%s1] sm:$0x3]
    %2385 = vrot.lane.b32.xlu0 %v2382, 96
    %v2386 = vpop.permute.xlu0 %2385
    %v2388 = vmul.f32 %v2383, %v2386
    %v2389 = vadd.f32 %v2377, %v2388
    %v2390 = vpack.c.bf16 %v2389, %v2389
    %v2391 = vld [vmem:[%s6] sm:$0xff]
    %v2392 = vld [vmem:[%s6 + $0x8] sm:$0xff]
    %v2393 = vld [vmem:[%s6 + $0x10] sm:$0xff]
    %v2394 = vld [vmem:[%s6 + $0x18] sm:$0xff]
    %v2395 = vld [vmem:[%s6 + $0x20] sm:$0xff]
    %v2396 = vld [vmem:[%s6 + $0x28] sm:$0xff]
    %v2397 = vld [vmem:[%s6 + $0x30] sm:$0xff]
    %v2398 = vld [vmem:[%s6 + $0x38] sm:$0xff]
    %v2399 = vld [vmem:[%s6 + $0x40] sm:$0xff]
    %v2400 = vld [vmem:[%s6 + $0x48] sm:$0xff]
    %v2401 = vld [vmem:[%s6 + $0x50] sm:$0xff]
    %v2402 = vld [vmem:[%s6 + $0x58] sm:$0xff]
    %v2403 = vld [vmem:[%s6 + $0x60] sm:$0xff]
    %v2404 = vld [vmem:[%s6 + $0x68] sm:$0xff]
    %v2405 = vld [vmem:[%s6 + $0x70] sm:$0xff]
    %v2406 = vld [vmem:[%s6 + $0x78] sm:$0xff]
    %v2407 = vld [vmem:[%s7] sm:$0xff]
    %v2409 = vperm.slane %v2407, 0
    %v2410 = vperm.slane %v2407, 1
    %v2411 = vperm.slane %v2407, 2
    %v2412 = vperm.slane %v2407, 3
    %v2413 = vperm.slane %v2407, 4
    %v2414 = vperm.slane %v2407, 5
    %v2415 = vperm.slane %v2407, 6
    %v2416 = vperm.slane %v2407, 7
    %v2441 = vunpack.c.l.b16 %v2391
    %v2442 = vunpack.c.h.b16 %v2391
    %v2443 = vunpack.c.l.b16 %v2392
    %v2444 = vunpack.c.h.b16 %v2392
    %v2445 = vunpack.c.l.b16 %v2393
    %v2446 = vunpack.c.h.b16 %v2393
    %v2447 = vunpack.c.l.b16 %v2394
    %v2448 = vunpack.c.h.b16 %v2394
    %v2449 = vunpack.c.l.b16 %v2395
    %v2450 = vunpack.c.h.b16 %v2395
    %v2451 = vunpack.c.l.b16 %v2396
    %v2452 = vunpack.c.h.b16 %v2396
    %v2453 = vunpack.c.l.b16 %v2397
    %v2454 = vunpack.c.h.b16 %v2397
    %v2455 = vunpack.c.l.b16 %v2398
    %v2456 = vunpack.c.h.b16 %v2398
    %v2457 = vunpack.c.l.b16 %v2399
    %v2458 = vunpack.c.h.b16 %v2399
    %v2459 = vunpack.c.l.b16 %v2400
    %v2460 = vunpack.c.h.b16 %v2400
    %v2461 = vunpack.c.l.b16 %v2401
    %v2462 = vunpack.c.h.b16 %v2401
    %v2463 = vunpack.c.l.b16 %v2402
    %v2464 = vunpack.c.h.b16 %v2402
    %v2465 = vunpack.c.l.b16 %v2403
    %v2466 = vunpack.c.h.b16 %v2403
    %v2467 = vunpack.c.l.b16 %v2404
    %v2468 = vunpack.c.h.b16 %v2404
    %v2469 = vunpack.c.l.b16 %v2405
    %v2470 = vunpack.c.h.b16 %v2405
    %v2471 = vunpack.c.l.b16 %v2406
    %v2472 = vunpack.c.h.b16 %v2406
    %v2473 = vpack.c.b16 %v2449, %v2441
    %v2474 = vpack.c.b16 %v2450, %v2442
    %v2475 = vpack.c.b16 %v2451, %v2443
    %v2476 = vpack.c.b16 %v2452, %v2444
    %v2477 = vpack.c.b16 %v2453, %v2445
    %v2478 = vpack.c.b16 %v2454, %v2446
    %v2479 = vpack.c.b16 %v2455, %v2447
    %v2480 = vpack.c.b16 %v2456, %v2448
    %v2481 = vpack.c.b16 %v2465, %v2457
    %v2482 = vpack.c.b16 %v2466, %v2458
    %v2483 = vpack.c.b16 %v2467, %v2459
    %v2484 = vpack.c.b16 %v2468, %v2460
    %v2485 = vpack.c.b16 %v2469, %v2461
    %v2486 = vpack.c.b16 %v2470, %v2462
    %v2487 = vpack.c.b16 %v2471, %v2463
    %v2488 = vpack.c.b16 %v2472, %v2464
    %vm2505 = vcmask 261120
    %v2507 = vsel %vm2505, %v2390, 0
    %2509 = vmatpush.bf16.msra.mxu0 0
    %2510 = vmatpush.bf16.msra.mxu0 0
    %2511 = vmatpush.bf16.msra.mxu0 0
    %2512 = vmatpush.bf16.msra.mxu0 0
    %2513 = vmatpush.bf16.msra.mxu0 0
    %2514 = vmatpush.bf16.msra.mxu0 0
    %2515 = vmatpush.bf16.msra.mxu0 %v2481
    %2516 = vmatpush.bf16.msra.mxu0 %v2473
    %2517 = vmatmul.bf16.gmra.mxu0 %v2507
    %v2518 = vpop.f32.mrf.mxu0
    %v2519 = vadd.f32 %v2409, %v2518
    %v2520 = vpop.f32.mrf.mxu0
    %2521 = vdwg.mxu0
    %2522 = vmatpush.bf16.msra.mxu0 0
    %2523 = vmatpush.bf16.msra.mxu0 0
    %2524 = vmatpush.bf16.msra.mxu0 0
    %2525 = vmatpush.bf16.msra.mxu0 0
    %2526 = vmatpush.bf16.msra.mxu0 0
    %2527 = vmatpush.bf16.msra.mxu0 0
    %2528 = vmatpush.bf16.msra.mxu0 %v2482
    %2529 = vmatpush.bf16.msra.mxu0 %v2474
    %2530 = vmatmul.bf16.gmra.mxu0 %v2507
    %v2531 = vpop.f32.mrf.mxu0
    %v2532 = vadd.f32 %v2410, %v2531
    %v2533 = vpop.f32.mrf.mxu0
    %2534 = vdwg.mxu0
    %2535 = vmatpush.bf16.msra.mxu0 0
    %2536 = vmatpush.bf16.msra.mxu0 0
    %2537 = vmatpush.bf16.msra.mxu0 0
    %2538 = vmatpush.bf16.msra.mxu0 0
    %2539 = vmatpush.bf16.msra.mxu0 0
    %2540 = vmatpush.bf16.msra.mxu0 0
    %2541 = vmatpush.bf16.msra.mxu0 %v2483
    %2542 = vmatpush.bf16.msra.mxu0 %v2475
    %2543 = vmatmul.bf16.gmra.mxu0 %v2507
    %v2544 = vpop.f32.mrf.mxu0
    %v2545 = vadd.f32 %v2411, %v2544
    %v2546 = vpop.f32.mrf.mxu0
    %2547 = vdwg.mxu0
    %2548 = vmatpush.bf16.msra.mxu0 0
    %2549 = vmatpush.bf16.msra.mxu0 0
    %2550 = vmatpush.bf16.msra.mxu0 0
    %2551 = vmatpush.bf16.msra.mxu0 0
    %2552 = vmatpush.bf16.msra.mxu0 0
    %2553 = vmatpush.bf16.msra.mxu0 0
    %2554 = vmatpush.bf16.msra.mxu0 %v2484
    %2555 = vmatpush.bf16.msra.mxu0 %v2476
    %2556 = vmatmul.bf16.gmra.mxu0 %v2507
    %v2557 = vpop.f32.mrf.mxu0
    %v2558 = vadd.f32 %v2412, %v2557
    %v2559 = vpop.f32.mrf.mxu0
    %2560 = vdwg.mxu0
    %2561 = vmatpush.bf16.msra.mxu0 0
    %2562 = vmatpush.bf16.msra.mxu0 0
    %2563 = vmatpush.bf16.msra.mxu0 0
    %2564 = vmatpush.bf16.msra.mxu0 0
    %2565 = vmatpush.bf16.msra.mxu0 0
    %2566 = vmatpush.bf16.msra.mxu0 0
    %2567 = vmatpush.bf16.msra.mxu0 %v2485
    %2568 = vmatpush.bf16.msra.mxu0 %v2477
    %2569 = vmatmul.bf16.gmra.mxu0 %v2507
    %v2570 = vpop.f32.mrf.mxu0
    %v2571 = vadd.f32 %v2413, %v2570
    %v2572 = vpop.f32.mrf.mxu0
    %2573 = vdwg.mxu0
    %2574 = vmatpush.bf16.msra.mxu0 0
    %2575 = vmatpush.bf16.msra.mxu0 0
    %2576 = vmatpush.bf16.msra.mxu0 0
    %2577 = vmatpush.bf16.msra.mxu0 0
    %2578 = vmatpush.bf16.msra.mxu0 0
    %2579 = vmatpush.bf16.msra.mxu0 0
    %2580 = vmatpush.bf16.msra.mxu0 %v2486
    %2581 = vmatpush.bf16.msra.mxu0 %v2478
    %2582 = vmatmul.bf16.gmra.mxu0 %v2507
    %v2583 = vpop.f32.mrf.mxu0
    %v2584 = vadd.f32 %v2414, %v2583
    %v2585 = vpop.f32.mrf.mxu0
    %2586 = vdwg.mxu0
    %2587 = vmatpush.bf16.msra.mxu0 0
    %2588 = vmatpush.bf16.msra.mxu0 0
    %2589 = vmatpush.bf16.msra.mxu0 0
    %2590 = vmatpush.bf16.msra.mxu0 0
    %2591 = vmatpush.bf16.msra.mxu0 0
    %2592 = vmatpush.bf16.msra.mxu0 0
    %2593 = vmatpush.bf16.msra.mxu0 %v2487
    %2594 = vmatpush.bf16.msra.mxu0 %v2479
    %2595 = vmatmul.bf16.gmra.mxu0 %v2507
    %v2596 = vpop.f32.mrf.mxu0
    %v2597 = vadd.f32 %v2415, %v2596
    %v2598 = vpop.f32.mrf.mxu0
    %2599 = vdwg.mxu0
    %2600 = vmatpush.bf16.msra.mxu0 0
    %2601 = vmatpush.bf16.msra.mxu0 0
    %2602 = vmatpush.bf16.msra.mxu0 0
    %2603 = vmatpush.bf16.msra.mxu0 0
    %2604 = vmatpush.bf16.msra.mxu0 0
    %2605 = vmatpush.bf16.msra.mxu0 0
    %2606 = vmatpush.bf16.msra.mxu0 %v2488
    %2607 = vmatpush.bf16.msra.mxu0 %v2480
    %2608 = vmatmul.bf16.gmra.mxu0 %v2507
    %v2609 = vpop.f32.mrf.mxu0
    %v2610 = vadd.f32 %v2416, %v2609
    %v2611 = vpop.f32.mrf.mxu0
    %2612 = vdwg.mxu0
    %v2613 = vtanh.pop %v2519
    %v2614 = vtanh.pop %v2532
    %v2615 = vtanh.pop %v2545
    %v2616 = vtanh.pop %v2558
    %v2617 = vtanh.pop %v2571
    %v2618 = vtanh.pop %v2584
    %v2619 = vtanh.pop %v2597
    %v2620 = vtanh.pop %v2610
    %v2629 = vrot.slane %v2614, 6
    %v2630 = vrot.slane %v2615, 4
    %v2631 = vrot.slane %v2616, 2
    %v2632 = vrot.slane %v2618, 6
    %v2633 = vrot.slane %v2619, 4
    %v2634 = vrot.slane %v2620, 2
    %vm2635 = vcmask 1041408
    %v2636 = vsel %vm2635, %v2613, %v2629
    %vm2637 = vcmask 1045508
    %v2638 = vsel %vm2637, %v2630, %v2631
    %vm2639 = vcmask 1043456
    %v2640 = vsel %vm2639, %v2636, %v2638
    %v2641 = vsel %vm2635, %v2617, %v2632
    %v2642 = vsel %vm2637, %v2633, %v2634
    %v2643 = vsel %vm2639, %v2641, %v2642
    %2646 = vst [vmem:[%s8] sm:$0xff] %v2640
    %2647 = vst [vmem:[%s8 + $0x8] sm:$0xff] %v2643
    %vm2648 = vcmask 254976
    %2649 = vst.msk [vmem:[#allocation7] sm:$0x3] %vm2648, %v2377
    %2651 = vrot.lane.b32.xlu0 %v2377, 96
    %v2652 = vpop.permute.xlu0 %2651
    %2654 = vst.msk [vmem:[#allocation8] sm:$0x3] %vm2648, %v2652
    // Predicated region
    $region42: #{vae_forward.1} parent=1 // pred_check
      _
    $region43: #{vae_forward.1} parent=1 // pred_check_branch
      %2656 = sbr.rel (0) target = $region45
    $region44: #{vae_forward.1} parent=1 // pred_region
      _
    $region45: #{vae_forward.1} parent=1 // pred_fallthru
      _
    // Predicated region
    $region46: #{vae_forward.1} parent=1 // pred_check
      _
    $region47: #{vae_forward.1} parent=1 // pred_check_branch
      %2658 = sbr.rel (0) target = $region49
    $region48: #{vae_forward.1} parent=1 // pred_region
      %2660 = vsyncadd [#allocation4], 0
      %s2662 = sshll.u32 [#allocation7], 4
      %s2663 = int_to_ptr.vmem [resolvable:$true] %s2662
      %s2664 = sshll.u32 %s9, 4
      %s2665 = int_to_ptr.hbm [resolvable:$true] %s2664
      %2667 = dma.vmem_to_hbm [thread:$0]  %s2663, 32, %s2665, [#allocation4]
    $region49: #{vae_forward.1} parent=1 // pred_fallthru
      _
    // Predicated region
    $region50: #{vae_forward.1} parent=1 // pred_check
      _
    $region51: #{vae_forward.1} parent=1 // pred_check_branch
      %2669 = sbr.rel (0) target = $region53
    $region52: #{vae_forward.1} parent=1 // pred_region
      %2671 = vsyncadd [#allocation9], 0
      %s2673 = sshll.u32 [#allocation8], 4
      %s2674 = int_to_ptr.vmem [resolvable:$true] %s2673
      %s2675 = sshll.u32 %s10, 4
      %s2676 = int_to_ptr.hbm [resolvable:$true] %s2675
      %2678 = dma.vmem_to_hbm [thread:$0]  %s2674, 32, %s2676, [#allocation9]
    $region53: #{vae_forward.1} parent=1 // pred_fallthru
      _
    // Predicated region
    $region54: #{vae_forward.1} parent=1 // pred_check
      _
    $region55: #{vae_forward.1} parent=1 // pred_check_branch
      %2680 = sbr.rel (0) target = $region57
    $region56: #{vae_forward.1} parent=1 // pred_region
      _
    $region57: #{vae_forward.1} parent=1 // pred_fallthru
      _
    // Predicated region
    $region58: #{vae_forward.1} parent=1 // pred_check
      _
    $region59: #{vae_forward.1} parent=1 // pred_check_branch
      %2682 = sbr.rel (0) target = $region61
    $region60: #{vae_forward.1} parent=1 // pred_region
      %2684 = dma.done [#allocation4], 32
    $region61: #{vae_forward.1} parent=1 // pred_fallthru
      _
    // Predicated region
    $region62: #{vae_forward.1} parent=1 // pred_check
      _
    $region63: #{vae_forward.1} parent=1 // pred_check_branch
      %2686 = sbr.rel (0) target = $region65
    $region64: #{vae_forward.1} parent=1 // pred_region
      %2688 = dma.done [#allocation9], 32
    $region65: #{vae_forward.1} parent=1 // pred_fallthru
      _
    %2689 = vsyncpa [#allocation3], 1
    %2690 = vsyncpa [#allocation6], 1
    %2691 = vsyncpa [#allocation4], 1
    %2692 = vsyncpa [#allocation9], 1

</llo_original>
